<compile_context>
chip_gen: v5e
topology: v5e:2x2
jax: 0.10.0
libtpu: 0.0.40
codegen_flags: <defaults>
</compile_context>

<pallas_src>
import functools

import jax
import jax.numpy as jnp
import numpy as np
from jax.experimental import pallas as pl
from jax.experimental.pallas import tpu as pltpu

LN_EPS = 1e-5  # PyTorch nn.LayerNorm default


def _cdiv(a, b):
    return -(-a // b)


def _round_up(n, m):
    return ((n + m - 1) // m) * m


def _layernorm(h, gamma, beta):
    """One-pass LayerNorm in f32: sum(h) and sum(h*h) are independent XLU
    reductions (can overlap); biased variance = E[h^2] - mu^2 (PyTorch)."""
    inv_n = 1.0 / h.shape[-1]
    s1 = jnp.sum(h, axis=-1, keepdims=True)
    s2 = jnp.sum(h * h, axis=-1, keepdims=True)
    mu = s1 * inv_n
    var = jnp.maximum(s2 * inv_n - mu * mu, 0.0)   # guard tiny cancellation
    return (h - mu) * jax.lax.rsqrt(var + LN_EPS) * gamma + beta


def critic_kernel(x_ref, w1_ref, w2_ref, p_ref, out_ref):
    # Packed 1-row params (one resident (8, H) f32 slab):
    # rows = [b1, g1, be1, b2, g2, be2, w3, b3(padded)]
    b1, g1, be1 = p_ref[0:1, :], p_ref[1:2, :], p_ref[2:3, :]
    b2, g2, be2 = p_ref[3:4, :], p_ref[4:5, :], p_ref[5:6, :]
    w3 = p_ref[6:7, :]           # head weight as a (1, H) row
    b3 = p_ref[7:8, 0:1]         # head bias as a (1, 1) tile

    # ---- Layer 1: Linear (bf16 MXU, f32 accumulate) -> LayerNorm -> ReLU ----
    h = jnp.dot(x_ref[...], w1_ref[...], preferred_element_type=jnp.float32) + b1
    h = jnp.maximum(_layernorm(h, g1, be1), 0.0)

    # ---- Layer 2: Linear -> LayerNorm -> ReLU ----
    h = jnp.dot(h.astype(jnp.bfloat16), w2_ref[...],
                preferred_element_type=jnp.float32) + b2
    h = jnp.maximum(_layernorm(h, g2, be2), 0.0)

    # ---- Head Linear(H, 1): contract over H to a lane-dense (1, TB) row ----
    # (1,H) x (tb,H)^T in f32 -> output store is an unmasked full-lane vst.
    v = jax.lax.dot_general(w3, h, (((1,), (1,)), ((), ())),
                            preferred_element_type=jnp.float32) + b3
    out_ref[...] = v.astype(out_ref.dtype)


def _choose_batch_tile(batch, obs_dim, hidden_dim, budget_bytes=18 * 1024 * 1024):
    """Largest multiple-of-128 batch tile that (a) keeps the working set well
    inside VMEM (v7x-safe) and (b) leaves >= 2 'parallel' tiles for megacore
    when the batch allows it."""
    # Resident: bf16 matmul weights + packed (8, H) f32 params.
    resident = 2 * (obs_dim + hidden_dim) * hidden_dim + 4 * 8 * hidden_dim
    # Per batch row: double-buffered bf16 x tile + f32 out lane + ~4 live (TB,H) f32 temps.
    per_row = 2 * 2 * obs_dim + 2 * 4 + 4 * 4 * hidden_dim
    tb = (budget_bytes - resident) // max(per_row, 1)
    tb = max(128, (tb // 128) * 128)   # lane-dense output row => multiple of 128
    tb = min(tb, 1024)                 # per-step overhead already amortized
    # v7x megacore: cap so any batch > 128 splits into >= 2 tiles.
    tb = min(tb, max(128, _round_up(_cdiv(batch, 2), 128)))
    return int(tb)


@functools.partial(jax.jit, static_argnames=("block_batch",))
def critic_forward(x, params, block_batch=None):
    """x: (B, obs_dim) float32 -> (B, 1) float32."""
    w1_bf, w2_bf, packed = params
    batch, obs_dim = x.shape
    hidden_dim = w1_bf.shape[1]

    tb = _choose_batch_tile(batch, obs_dim, hidden_dim) if block_batch is None \
        else int(block_batch)
    assert tb % 128 == 0, "batch tile must be a multiple of 128 (lane-dense output row)"

    num_tiles = _cdiv(batch, tb)
    b_pad = num_tiles * tb

    # Stream x in bf16 (matmul operands are bf16 anyway); zero-pad ragged tail.
    # Padded rows pass LayerNorm finitely (var=0 -> rsqrt(eps)) and are sliced off.
    x_bf = x.astype(jnp.bfloat16)
    if b_pad != batch:
        x_bf = jnp.concatenate(
            [x_bf, jnp.zeros((b_pad - batch, obs_dim), jnp.bfloat16)], axis=0)

    def _resident(shape):
        return pl.BlockSpec(shape, lambda i: (0, 0))

    in_specs = [
        pl.BlockSpec((tb, obs_dim), lambda i: (i, 0)),   # streamed x tile (bf16)
        _resident(w1_bf.shape),                          # (obs_dim, H) bf16, resident
        _resident(w2_bf.shape),                          # (H, H) bf16, resident
        _resident(packed.shape),                         # (8, H) f32, resident
    ]
    # Lane-dense output: one (1, tb) row per grid step of a (1, b_pad) slab.
    out_specs = pl.BlockSpec((1, tb), lambda i: (0, i))

    flops = 2 * b_pad * (obs_dim * hidden_dim + hidden_dim * hidden_dim
                         + hidden_dim) + 12 * b_pad * hidden_dim
    bytes_accessed = (2 * b_pad * obs_dim + 4 * b_pad
                      + 2 * (obs_dim + hidden_dim) * hidden_dim
                      + 4 * 8 * hidden_dim)

    out = pl.pallas_call(
        critic_kernel,
        grid=(num_tiles,),
        in_specs=in_specs,
        out_specs=out_specs,
        out_shape=jax.ShapeDtypeStruct((1, b_pad), jnp.float32),
        compiler_params=pltpu.CompilerParams(
            dimension_semantics=("parallel",),          # dual-TC sharding on v7x
            vmem_limit_bytes=32 * 1024 * 1024,          # explicit, safe on all gens
        ),
        cost_estimate=pl.CostEstimate(
            flops=int(flops),
            transcendentals=int(2 * b_pad),             # 2 rsqrt per row
            bytes_accessed=int(bytes_accessed),
        ),
    )(x_bf, w1_bf, w2_bf, packed)

    return out.reshape(b_pad, 1)[:batch]


def init_critic_params(key, obs_dim, hidden_dim):
    """Deterministic init matching the PyTorch module: orthogonal(gain=sqrt(2))
    weights, zero biases, LayerNorm gamma=1 / beta=0. Hidden weights stored
    transposed to (in, out) and pre-cast to bf16 once; all 1-row f32 params
    packed into a single (8, H) slab."""
    k1, k2, k3 = jax.random.split(key, 3)
    ortho = jax.nn.initializers.orthogonal(scale=float(np.sqrt(2.0)))

    # PyTorch Linear weight is (out, in); generate that then transpose to (in, out).
    w1 = ortho(k1, (hidden_dim, obs_dim), jnp.float32).T          # (obs_dim, H)
    w2 = ortho(k2, (hidden_dim, hidden_dim), jnp.float32).T       # (H, H)
    w3 = ortho(k3, (1, hidden_dim), jnp.float32)                  # (1, H) head row

    # rows = [b1, g1, be1, b2, g2, be2, w3, b3(padded)]
    packed = jnp.zeros((8, hidden_dim), jnp.float32)
    packed = packed.at[1, :].set(1.0)        # LN1 gamma
    packed = packed.at[4, :].set(1.0)        # LN2 gamma
    packed = packed.at[6, :].set(w3[0])      # head weight row
    # b1 / be1 / b2 / be2 / b3 are zero per the PyTorch init (constant_(bias, 0)).

    return (w1.astype(jnp.bfloat16), w2.astype(jnp.bfloat16), packed)


def critic_ref(x, params):
    """Pure-JAX reference with the same numerics as the kernel (bf16 matmul
    operands, f32 accumulation, f32 LayerNorm/ReLU/head). vs a strict f32
    PyTorch forward the bf16 operands introduce ~1e-2 level deviations,
    negligible for an RL value head."""
    w1_bf, w2_bf, packed = params
    b1, g1, be1 = packed[0], packed[1], packed[2]
    b2, g2, be2 = packed[3], packed[4], packed[5]
    w3, b3 = packed[6], packed[7, 0]

    def ln(h, g, b):
        mu = jnp.mean(h, axis=-1, keepdims=True)
        var = jnp.mean((h - mu) ** 2, axis=-1, keepdims=True)
        return (h - mu) / jnp.sqrt(var + LN_EPS) * g + b

    h = jnp.dot(x.astype(jnp.bfloat16), w1_bf, preferred_element_type=jnp.float32) + b1
    h = jax.nn.relu(ln(h, g1, be1))
    h = jnp.dot(h.astype(jnp.bfloat16), w2_bf, preferred_element_type=jnp.float32) + b2
    h = jax.nn.relu(ln(h, g2, be2))
    return jnp.sum(h * w3, axis=-1, keepdims=True) + b3


if __name__ == "__main__":
    # hidden_dim=256 matches the PyTorch default (and fills the 256-wide MXU on
    # v6e/v7x). batch=200 with block_batch=128 exercises a 2-tile grid (both
    # TensorCores on v7x), batch padding, resident weights and the lane-dense
    # output path.
    batch, obs_dim, hidden_dim = 200, 24, 256

    key = jax.random.PRNGKey(0)
    kx, kp = jax.random.split(key)

    x = jax.random.normal(kx, (batch, obs_dim), dtype=jnp.float32)
    params = init_critic_params(kp, obs_dim, hidden_dim)

    out = critic_forward(x, params, block_batch=128)
    out = jax.block_until_ready(out)

    ref = critic_ref(x, params)
    assert out.shape == (batch, 1), out.shape
    np.testing.assert_allclose(np.asarray(out), np.asarray(ref),
                               rtol=1e-3, atol=1e-3)

    # Also exercise the auto-chosen tile path (also 2 tiles of 128 at this size).
    out2 = jax.block_until_ready(critic_forward(x, params))
    np.testing.assert_allclose(np.asarray(out2), np.asarray(ref),
                               rtol=1e-3, atol=1e-3)

    print("KERNEL_OK")
</pallas_src>

<mosaic_0001>
module attributes {stable_mosaic.version = 11 : i64} {
  func.func @critic_kernel(%arg0: i32, %arg1: memref<128x24xbf16, #tpu.memory_space<vmem>>, %arg2: memref<24x256xbf16, #tpu.memory_space<vmem>>, %arg3: memref<256x256xbf16, #tpu.memory_space<vmem>>, %arg4: memref<8x256xf32, #tpu.memory_space<vmem>>, %arg5: memref<1x128xf32, #tpu.memory_space<vmem>>) attributes {dimension_semantics = [#tpu.dimension_semantics<parallel>], iteration_bounds = array<i64: 2>, scalar_prefetch = 0 : i64, scratch_operands = 0 : i64, tpu.core_type = #tpu.core_type<tc>, window_params = [{transform_indices = @transform_0, window_bounds = array<i64: 128, 24>}, {pipeline_mode = #tpu.pipeline_mode<synchronous>, transform_indices = @transform_1, window_bounds = array<i64: 24, 256>}, {pipeline_mode = #tpu.pipeline_mode<synchronous>, transform_indices = @transform_2, window_bounds = array<i64: 256, 256>}, {pipeline_mode = #tpu.pipeline_mode<synchronous>, transform_indices = @transform_3, window_bounds = array<i64: 8, 256>}, {transform_indices = @transform_4, window_bounds = array<i64: 1, 128>}]} {
    %c0 = arith.constant 0 : index
    %c0_0 = arith.constant 0 : index
    %0 = vector.load %arg4[%c0, %c0_0] : memref<8x256xf32, #tpu.memory_space<vmem>>, vector<1x256xf32>
    %c1 = arith.constant 1 : index
    %c0_1 = arith.constant 0 : index
    %1 = vector.load %arg4[%c1, %c0_1] : memref<8x256xf32, #tpu.memory_space<vmem>>, vector<1x256xf32>
    %c2 = arith.constant 2 : index
    %c0_2 = arith.constant 0 : index
    %2 = vector.load %arg4[%c2, %c0_2] : memref<8x256xf32, #tpu.memory_space<vmem>>, vector<1x256xf32>
    %c3 = arith.constant 3 : index
    %c0_3 = arith.constant 0 : index
    %3 = vector.load %arg4[%c3, %c0_3] : memref<8x256xf32, #tpu.memory_space<vmem>>, vector<1x256xf32>
    %c4 = arith.constant 4 : index
    %c0_4 = arith.constant 0 : index
    %4 = vector.load %arg4[%c4, %c0_4] : memref<8x256xf32, #tpu.memory_space<vmem>>, vector<1x256xf32>
    %c5 = arith.constant 5 : index
    %c0_5 = arith.constant 0 : index
    %5 = vector.load %arg4[%c5, %c0_5] : memref<8x256xf32, #tpu.memory_space<vmem>>, vector<1x256xf32>
    %c6 = arith.constant 6 : index
    %c0_6 = arith.constant 0 : index
    %6 = vector.load %arg4[%c6, %c0_6] : memref<8x256xf32, #tpu.memory_space<vmem>>, vector<1x256xf32>
    %c7 = arith.constant 7 : index
    %c0_7 = arith.constant 0 : index
    %7 = vector.load %arg4[%c7, %c0_7] : memref<8x256xf32, #tpu.memory_space<vmem>>, vector<1x1xf32>
    %c0_8 = arith.constant 0 : index
    %c0_9 = arith.constant 0 : index
    %8 = vector.load %arg1[%c0_8, %c0_9] : memref<128x24xbf16, #tpu.memory_space<vmem>>, vector<128x24xbf16>
    %c0_10 = arith.constant 0 : index
    %c0_11 = arith.constant 0 : index
    %9 = vector.load %arg2[%c0_10, %c0_11] : memref<24x256xbf16, #tpu.memory_space<vmem>>, vector<24x256xbf16>
    %cst = arith.constant dense<0.000000e+00> : vector<128x256xf32>
    %10 = tpu.matmul %8, %9, %cst {dimension_numbers = #tpu.dot_dimension_numbers<[1], [0], [0], [1], [0, 0, 1, 1], [], []>} : vector<128x24xbf16>, vector<24x256xbf16>, vector<128x256xf32> -> vector<128x256xf32>
    %11 = vector.broadcast %0 : vector<1x256xf32> to vector<128x256xf32>
    %12 = arith.addf %10, %11 : vector<128x256xf32>
    %cst_12 = arith.constant dense<0.000000e+00> : vector<128xf32>
    %13 = vector.multi_reduction <add>, %12, %cst_12 [1] : vector<128x256xf32> to vector<128xf32>
    %14 = vector.shape_cast %13 : vector<128xf32> to vector<128x1xf32>
    %15 = arith.mulf %12, %12 : vector<128x256xf32>
    %cst_13 = arith.constant dense<0.000000e+00> : vector<128xf32>
    %16 = vector.multi_reduction <add>, %15, %cst_13 [1] : vector<128x256xf32> to vector<128xf32>
    %17 = vector.shape_cast %16 : vector<128xf32> to vector<128x1xf32>
    %cst_14 = arith.constant 3.906250e-03 : f32
    %18 = vector.broadcast %cst_14 : f32 to vector<128x1xf32>
    %19 = arith.mulf %14, %18 : vector<128x1xf32>
    %cst_15 = arith.constant 3.906250e-03 : f32
    %20 = vector.broadcast %cst_15 : f32 to vector<128x1xf32>
    %21 = arith.mulf %17, %20 : vector<128x1xf32>
    %22 = arith.mulf %19, %19 : vector<128x1xf32>
    %23 = arith.subf %21, %22 : vector<128x1xf32>
    %cst_16 = arith.constant 0.000000e+00 : f32
    %24 = vector.broadcast %cst_16 : f32 to vector<128x1xf32>
    %25 = arith.maximumf %23, %24 : vector<128x1xf32>
    %26 = vector.broadcast %19 : vector<128x1xf32> to vector<128x256xf32>
    %27 = arith.subf %12, %26 : vector<128x256xf32>
    %cst_17 = arith.constant 9.99999974E-6 : f32
    %28 = vector.broadcast %cst_17 : f32 to vector<128x1xf32>
    %29 = arith.addf %25, %28 : vector<128x1xf32>
    %30 = math.rsqrt %29 : vector<128x1xf32>
    %31 = vector.broadcast %30 : vector<128x1xf32> to vector<128x256xf32>
    %32 = arith.mulf %27, %31 : vector<128x256xf32>
    %33 = vector.broadcast %1 : vector<1x256xf32> to vector<128x256xf32>
    %34 = arith.mulf %32, %33 : vector<128x256xf32>
    %35 = vector.broadcast %2 : vector<1x256xf32> to vector<128x256xf32>
    %36 = arith.addf %34, %35 : vector<128x256xf32>
    %cst_18 = arith.constant 0.000000e+00 : f32
    %37 = vector.broadcast %cst_18 : f32 to vector<128x256xf32>
    %38 = arith.maximumf %36, %37 : vector<128x256xf32>
    %39 = arith.truncf %38 : vector<128x256xf32> to vector<128x256xbf16>
    %c0_19 = arith.constant 0 : index
    %c0_20 = arith.constant 0 : index
    %40 = vector.load %arg3[%c0_19, %c0_20] : memref<256x256xbf16, #tpu.memory_space<vmem>>, vector<256x256xbf16>
    %cst_21 = arith.constant dense<0.000000e+00> : vector<128x256xf32>
    %41 = tpu.matmul %39, %40, %cst_21 {dimension_numbers = #tpu.dot_dimension_numbers<[1], [0], [0], [1], [0, 0, 1, 1], [], []>} : vector<128x256xbf16>, vector<256x256xbf16>, vector<128x256xf32> -> vector<128x256xf32>
    %42 = vector.broadcast %3 : vector<1x256xf32> to vector<128x256xf32>
    %43 = arith.addf %41, %42 : vector<128x256xf32>
    %cst_22 = arith.constant dense<0.000000e+00> : vector<128xf32>
    %44 = vector.multi_reduction <add>, %43, %cst_22 [1] : vector<128x256xf32> to vector<128xf32>
    %45 = vector.shape_cast %44 : vector<128xf32> to vector<128x1xf32>
    %46 = arith.mulf %43, %43 : vector<128x256xf32>
    %cst_23 = arith.constant dense<0.000000e+00> : vector<128xf32>
    %47 = vector.multi_reduction <add>, %46, %cst_23 [1] : vector<128x256xf32> to vector<128xf32>
    %48 = vector.shape_cast %47 : vector<128xf32> to vector<128x1xf32>
    %cst_24 = arith.constant 3.906250e-03 : f32
    %49 = vector.broadcast %cst_24 : f32 to vector<128x1xf32>
    %50 = arith.mulf %45, %49 : vector<128x1xf32>
    %cst_25 = arith.constant 3.906250e-03 : f32
    %51 = vector.broadcast %cst_25 : f32 to vector<128x1xf32>
    %52 = arith.mulf %48, %51 : vector<128x1xf32>
    %53 = arith.mulf %50, %50 : vector<128x1xf32>
    %54 = arith.subf %52, %53 : vector<128x1xf32>
    %cst_26 = arith.constant 0.000000e+00 : f32
    %55 = vector.broadcast %cst_26 : f32 to vector<128x1xf32>
    %56 = arith.maximumf %54, %55 : vector<128x1xf32>
    %57 = vector.broadcast %50 : vector<128x1xf32> to vector<128x256xf32>
    %58 = arith.subf %43, %57 : vector<128x256xf32>
    %cst_27 = arith.constant 9.99999974E-6 : f32
    %59 = vector.broadcast %cst_27 : f32 to vector<128x1xf32>
    %60 = arith.addf %56, %59 : vector<128x1xf32>
    %61 = math.rsqrt %60 : vector<128x1xf32>
    %62 = vector.broadcast %61 : vector<128x1xf32> to vector<128x256xf32>
    %63 = arith.mulf %58, %62 : vector<128x256xf32>
    %64 = vector.broadcast %4 : vector<1x256xf32> to vector<128x256xf32>
    %65 = arith.mulf %63, %64 : vector<128x256xf32>
    %66 = vector.broadcast %5 : vector<1x256xf32> to vector<128x256xf32>
    %67 = arith.addf %65, %66 : vector<128x256xf32>
    %cst_28 = arith.constant 0.000000e+00 : f32
    %68 = vector.broadcast %cst_28 : f32 to vector<128x256xf32>
    %69 = arith.maximumf %67, %68 : vector<128x256xf32>
    %cst_29 = arith.constant dense<0.000000e+00> : vector<1x128xf32>
    %70 = tpu.matmul %6, %69, %cst_29 {dimension_numbers = #tpu.dot_dimension_numbers<[1], [1], [0], [0], [0, 0, 1, 0], [], []>} : vector<1x256xf32>, vector<128x256xf32>, vector<1x128xf32> -> vector<1x128xf32>
    %71 = vector.broadcast %7 : vector<1x1xf32> to vector<1x128xf32>
    %72 = arith.addf %70, %71 : vector<1x128xf32>
    %c0_30 = arith.constant 0 : index
    %c0_31 = arith.constant 0 : index
    %73 = vector.load %arg5[%c0_30, %c0_31] : memref<1x128xf32, #tpu.memory_space<vmem>>, vector<1x128xf32>
    tpu.vector_store %arg5[%c0_30, %c0_31], %72 {strides = array<i32>} : memref<1x128xf32, #tpu.memory_space<vmem>>, vector<1x128xf32>,
    return
  }
  func.func @transform_0(%arg0: i32) -> (i32, i32) {
    %c0_i32 = arith.constant 0 : i32
    %c0_i32_0 = arith.constant 0 : i32
    return %arg0, %c0_i32 : i32, i32
  }
  func.func @transform_1(%arg0: i32) -> (i32, i32) {
    %c0_i32 = arith.constant 0 : i32
    %c0_i32_0 = arith.constant 0 : i32
    %c0_i32_1 = arith.constant 0 : i32
    return %c0_i32, %c0_i32_0 : i32, i32
  }
  func.func @transform_2(%arg0: i32) -> (i32, i32) {
    %c0_i32 = arith.constant 0 : i32
    %c0_i32_0 = arith.constant 0 : i32
    %c0_i32_1 = arith.constant 0 : i32
    return %c0_i32, %c0_i32_0 : i32, i32
  }
  func.func @transform_3(%arg0: i32) -> (i32, i32) {
    %c0_i32 = arith.constant 0 : i32
    %c0_i32_0 = arith.constant 0 : i32
    %c0_i32_1 = arith.constant 0 : i32
    return %c0_i32, %c0_i32_0 : i32, i32
  }
  func.func @transform_4(%arg0: i32) -> (i32, i32) {
    %c0_i32 = arith.constant 0 : i32
    %c0_i32_0 = arith.constant 0 : i32
    return %c0_i32, %arg0 : i32, i32
  }
}

</mosaic_0001>

<llo_original>
// kernel: critic_forward.1
$region0: #{critic_forward.1}
  #allocation0 [shape = 'u32[]', space=smem, size = 0x4, offset = 0x4, fixed_abs, tag = 'smem constant byte address 0x4 - core index']
  #allocation1 [shape = 'u32[72,128]{1,0:T(1,128)}', space=vmem, size = 0x9000, scoped, tag = 'internal scratch']
  %s0 = inlined_call_operand.vmem [shape: bf16[256,24], index: 0, kind: input, shape index: {}]
  %s1 = inlined_call_operand.vmem [shape: bf16[24,256], index: 1, kind: input, shape index: {}]
  %s2 = inlined_call_operand.vmem [shape: bf16[256,256], index: 2, kind: input, shape index: {}]
  %s3 = inlined_call_operand.vmem [shape: f32[8,256], index: 3, kind: input, shape index: {}]
  %s4 = inlined_call_operand.vmem [shape: f32[1,256], index: 4, kind: output, shape index: {}]
  %s5 = sld [smem:[#allocation0]]
  $region49: #{critic_forward.1} parent=0
    _
  %s7 = ssub.s32 1, %s5
  %s8 = scalar_select 0, %s7, %s5
  loop: start=0, step=1, limit=4
  $region2: #{critic_forward.1} parent=0 // loop_pre_header
    _
  $region3: #{critic_forward.1} parent=0 // loop_header
    %s10 = sphi 0, %s14
    %p11 = scmp.ge.s32.totalorder %s10, 4
    %s20 = sphi 0, %s22
    %s23 = sphi 0, %s20
    %s24 = sphi 0, %s23
    %s40 = sphi 0, %s24
    %s44 = sphi 0, %s44
    %s46 = sphi 0, %s44
    %s47 = sphi 0, %s46
    %s61 = sphi 0, %s47
    %s65 = sphi 0, %s65
    %s67 = sphi 0, %s65
    %s68 = sphi 0, %s67
    %s82 = sphi 0, %s68
    %s86 = sphi 0, %s86
    %s88 = sphi 0, %s86
    %s89 = sphi 0, %s88
    %s103 = sphi 0, %s89
    %s109 = sphi 0, %s111
    %s112 = sphi 0, %s109
    %s113 = sphi 0, %s112
    %s129 = sphi 0, %s113
  $region4: #{critic_forward.1} parent=0 // loop_header_branch
    %13 = sbr.rel (%p11) target = $region8
  $region5: #{critic_forward.1} parent=0 // loop_body
    %s15 = ssub.s32 %s10, 1
    %s16 = ssub.s32 %s10, 2
    %s17 = sadd.s32 %s10, 1
    %s18 = ssub.s32 %s10, %s17
    %p19 = scmp.eq.s32.totalorder %s18, 0
    %s21 = sadd.s32 %s20, 1
    %s22 = scalar_select %p19, %s20, %s21
    %p25 = pneg %p19
    %p26 = scmp.eq.s32.totalorder %s10, 1
    %p27 = por %p25, %p26
    %p28 = scmp.ne.s32.totalorder %s20, %s23
    %p29 = scmp.eq.s32.totalorder %s10, 0
    %p30 = por %p28, %p29
    %p31 = scmp.ne.s32.totalorder %s20, %s23
    %p32 = scmp.eq.s32.totalorder %s15, 1
    %p33 = por %p31, %p32
    %p34 = scmp.ne.s32.totalorder %s23, %s24
    %p35 = scmp.eq.s32.totalorder %s15, 0
    %p36 = por %p34, %p35
    %p37 = scmp.ne.s32.totalorder %s23, %s24
    %p38 = scmp.eq.s32.totalorder %s16, 1
    %p39 = por %p37, %p38
    %p41 = scmp.ne.s32.totalorder %s24, %s40
    %p42 = scmp.eq.s32.totalorder %s16, 0
    %p43 = por %p41, %p42
    %s45 = sadd.s32 %s44, 1
    %p48 = scmp.eq.s32.totalorder %s10, 1
    %p49 = scmp.ne.s32.totalorder %s44, %s46
    %p50 = scmp.eq.s32.totalorder %s10, 0
    %p51 = por %p49, %p50
    %p52 = scmp.ne.s32.totalorder %s44, %s46
    %p53 = scmp.eq.s32.totalorder %s15, 1
    %p54 = por %p52, %p53
    %p55 = scmp.ne.s32.totalorder %s46, %s47
    %p56 = scmp.eq.s32.totalorder %s15, 0
    %p57 = por %p55, %p56
    %p58 = scmp.ne.s32.totalorder %s46, %s47
    %p59 = scmp.eq.s32.totalorder %s16, 1
    %p60 = por %p58, %p59
    %p62 = scmp.ne.s32.totalorder %s47, %s61
    %p63 = scmp.eq.s32.totalorder %s16, 0
    %p64 = por %p62, %p63
    %s66 = sadd.s32 %s65, 1
    %p69 = scmp.eq.s32.totalorder %s10, 1
    %p70 = scmp.ne.s32.totalorder %s65, %s67
    %p71 = scmp.eq.s32.totalorder %s10, 0
    %p72 = por %p70, %p71
    %p73 = scmp.ne.s32.totalorder %s65, %s67
    %p74 = scmp.eq.s32.totalorder %s15, 1
    %p75 = por %p73, %p74
    %p76 = scmp.ne.s32.totalorder %s67, %s68
    %p77 = scmp.eq.s32.totalorder %s15, 0
    %p78 = por %p76, %p77
    %p79 = scmp.ne.s32.totalorder %s67, %s68
    %p80 = scmp.eq.s32.totalorder %s16, 1
    %p81 = por %p79, %p80
    %p83 = scmp.ne.s32.totalorder %s68, %s82
    %p84 = scmp.eq.s32.totalorder %s16, 0
    %p85 = por %p83, %p84
    %s87 = sadd.s32 %s86, 1
    %p90 = scmp.eq.s32.totalorder %s10, 1
    %p91 = scmp.ne.s32.totalorder %s86, %s88
    %p92 = scmp.eq.s32.totalorder %s10, 0
    %p93 = por %p91, %p92
    %p94 = scmp.ne.s32.totalorder %s86, %s88
    %p95 = scmp.eq.s32.totalorder %s15, 1
    %p96 = por %p94, %p95
    %p97 = scmp.ne.s32.totalorder %s88, %s89
    %p98 = scmp.eq.s32.totalorder %s15, 0
    %p99 = por %p97, %p98
    %p100 = scmp.ne.s32.totalorder %s88, %s89
    %p101 = scmp.eq.s32.totalorder %s16, 1
    %p102 = por %p100, %p101
    %p104 = scmp.ne.s32.totalorder %s89, %s103
    %p105 = scmp.eq.s32.totalorder %s16, 0
    %p106 = por %p104, %p105
    %s107 = ssub.s32 %s10, %s17
    %p108 = scmp.eq.s32.totalorder %s107, 0
    %s110 = sadd.s32 %s109, 1
    %s111 = scalar_select %p108, %s109, %s110
    %p114 = pneg %p108
    %p115 = scmp.eq.s32.totalorder %s10, 1
    %p116 = por %p114, %p115
    %p117 = scmp.ne.s32.totalorder %s109, %s112
    %p118 = scmp.eq.s32.totalorder %s10, 0
    %p119 = por %p117, %p118
    %p120 = scmp.ne.s32.totalorder %s109, %s112
    %p121 = scmp.eq.s32.totalorder %s15, 1
    %p122 = por %p120, %p121
    %p123 = scmp.ne.s32.totalorder %s112, %s113
    %p124 = scmp.eq.s32.totalorder %s15, 0
    %p125 = por %p123, %p124
    %p126 = scmp.ne.s32.totalorder %s112, %s113
    %p127 = scmp.eq.s32.totalorder %s16, 1
    %p128 = por %p126, %p127
    %p130 = scmp.ne.s32.totalorder %s113, %s129
    %p131 = scmp.eq.s32.totalorder %s16, 0
    %p132 = por %p130, %p131
    %p133 = scmp.le.s32.totalorder 1, %s10
    %p134 = scmp.lt.s32.totalorder %s10, 3
    %p135 = pnand %p133, %p134
    %p136 = pneg %p135
    // Predicated region
    $region9: #{critic_forward.1} parent=5 // pred_check
      _
    $region10: #{critic_forward.1} parent=5 // pred_check_branch
      %138 = sbr.rel (%p135) target = $region12
    $region11: #{critic_forward.1} parent=5 // pred_region
      %s139 = ssub.s32 %s10, 1
      // Predicated region
      $region13: #{critic_forward.1} parent=11 // pred_check
        %p140 = pneg %p57
      $region14: #{critic_forward.1} parent=11 // pred_check_branch
        %142 = sbr.rel (%p140) target = $region16
      $region15: #{critic_forward.1} parent=11 // pred_region
        _
      $region16: #{critic_forward.1} parent=11 // pred_fallthru
        _
      // Predicated region
      $region17: #{critic_forward.1} parent=11 // pred_check
        %p143 = pneg %p78
      $region18: #{critic_forward.1} parent=11 // pred_check_branch
        %145 = sbr.rel (%p143) target = $region20
      $region19: #{critic_forward.1} parent=11 // pred_region
        _
      $region20: #{critic_forward.1} parent=11 // pred_fallthru
        _
      // Predicated region
      $region21: #{critic_forward.1} parent=11 // pred_check
        %p146 = pneg %p99
      $region22: #{critic_forward.1} parent=11 // pred_check_branch
        %148 = sbr.rel (%p146) target = $region24
      $region23: #{critic_forward.1} parent=11 // pred_region
        _
      $region24: #{critic_forward.1} parent=11 // pred_fallthru
        _
    $region12: #{critic_forward.1} parent=5 // pred_fallthru
      _
    %p149 = scmp.lt.s32.totalorder %s10, 2
    // Predicated region
    $region25: #{critic_forward.1} parent=5 // pred_check
      %p150 = pneg %p149
    $region26: #{critic_forward.1} parent=5 // pred_check_branch
      %152 = sbr.rel (%p150) target = $region28
    $region27: #{critic_forward.1} parent=5 // pred_region
      // Predicated region
      $region29: #{critic_forward.1} parent=27 // pred_check
        %p153 = pneg %p30
      $region30: #{critic_forward.1} parent=27 // pred_check_branch
        %155 = sbr.rel (%p153) target = $region32
      $region31: #{critic_forward.1} parent=27 // pred_region
        %s156 = smul.u32 16, %s10
        %p157 = scmp.lt.s32.totalorder %s156, 31
        %s158 = scalar_select %p157, %s156, 31
        %s159 = smul.addr %s158, 4
        %s160 = scalar_lea.vmem %s0, %s159
        %s161 = smul.u32 16, %s10
      $region32: #{critic_forward.1} parent=27 // pred_fallthru
        _
    $region28: #{critic_forward.1} parent=5 // pred_fallthru
      _
    %p162 = scmp.le.s32.totalorder 1, %s10
    %p163 = scmp.lt.s32.totalorder %s10, 3
    %p164 = pnand %p162, %p163
    %p165 = pneg %p164
    // Predicated region
    $region33: #{critic_forward.1} parent=5 // pred_check
      _
    $region34: #{critic_forward.1} parent=5 // pred_check_branch
      %167 = sbr.rel (%p164) target = $region36
    $region35: #{critic_forward.1} parent=5 // pred_region
      %s168 = ssub.s32 %s10, 1
      %s169 = smul.u32 16, %s15
      %p170 = scmp.lt.s32.totalorder %s169, 31
      %s171 = scalar_select %p170, %s169, 31
      %s172 = smul.addr %s171, 4
      %s173 = scalar_lea.vmem %s0, %s172
      %p174 = pneg %p36
      %p175 = pneg %p33
      %p176 = pneg %p57
      %p177 = pneg %p54
      %p178 = pneg %p78
      %p179 = pneg %p75
      %p180 = pneg %p99
      %p181 = pneg %p96
      %p182 = pneg %p125
      %p183 = pneg %p122
      %p184 = scmp.lt.s32.totalorder %s15, 1
      %s185 = scalar_select %p184, %s15, 1
      %s186 = scalar_lea.vmem %s4, %s185
      %s187 = smul.u32 16, %s15
      %p188 = scmp.lt.s32.totalorder %s187, 31
      %s189 = scalar_select %p188, %s187, 31
      %s190 = smul.addr %s189, 4
      %s191 = scalar_lea.vmem %s0, %s190
      %s192 = smul.u32 16, %s15
      %p193 = scmp.lt.s32.totalorder %s15, 1
      %s194 = scalar_select %p193, %s15, 1
      %s195 = scalar_lea.vmem %s4, %s194
      %v197 = vld [vmem:[%s3] ss:$8 sm:$0x3]
      %s198 = scalar_lea.vmem %s3, 1
      %v199 = vld [vmem:[%s198] ss:$8 sm:$0x3]
      %s200 = scalar_lea.vmem %s3, 2
      %v201 = vld [vmem:[%s200] ss:$8 sm:$0x3]
      %s202 = scalar_lea.vmem %s3, 3
      %v203 = vld [vmem:[%s202] ss:$8 sm:$0x3]
      %s204 = scalar_lea.vmem %s3, 4
      %v205 = vld [vmem:[%s204] ss:$8 sm:$0x3]
      %s206 = scalar_lea.vmem %s3, 5
      %v207 = vld [vmem:[%s206] ss:$8 sm:$0x3]
      %s208 = scalar_lea.vmem %s3, 6
      %v209 = vld [vmem:[%s208] ss:$8 sm:$0x3]
      %v210 = vld [vmem:[%s3 + $0x7] ss:$0 sm:$0xff]
      %v211 = vld [vmem:[%s191] sm:$0xf]
      %v212 = vld [vmem:[%s191 + $0x4] sm:$0xf]
      %v213 = vld [vmem:[%s191 + $0x8] sm:$0xf]
      %v214 = vld [vmem:[%s191 + $0xc] sm:$0xf]
      %v215 = vld [vmem:[%s191 + $0x10] sm:$0xf]
      %v216 = vld [vmem:[%s191 + $0x14] sm:$0xf]
      %v217 = vld [vmem:[%s191 + $0x18] sm:$0xf]
      %v218 = vld [vmem:[%s191 + $0x1c] sm:$0xf]
      %v219 = vld [vmem:[%s191 + $0x20] sm:$0xf]
      %v220 = vld [vmem:[%s191 + $0x24] sm:$0xf]
      %v221 = vld [vmem:[%s191 + $0x28] sm:$0xf]
      %v222 = vld [vmem:[%s191 + $0x2c] sm:$0xf]
      %v223 = vld [vmem:[%s191 + $0x30] sm:$0xf]
      %v224 = vld [vmem:[%s191 + $0x34] sm:$0xf]
      %v225 = vld [vmem:[%s191 + $0x38] sm:$0xf]
      %v226 = vld [vmem:[%s191 + $0x3c] sm:$0xf]
      %v227 = vld [vmem:[%s1] sm:$0xff]
      %v228 = vld [vmem:[%s1 + $0x8] sm:$0xff]
      %v229 = vld [vmem:[%s1 + $0x10] sm:$0xff]
      %v231 = vperm.slane %v197, 0
      %v232 = vperm.slane %v197, 1
      %v251 = vunpack.c.l.b16 %v211
      %v252 = vunpack.c.l.b16 %v212
      %v253 = vunpack.c.l.b16 %v213
      %v254 = vunpack.c.l.b16 %v214
      %v255 = vunpack.c.l.b16 %v215
      %v256 = vunpack.c.l.b16 %v216
      %v257 = vunpack.c.l.b16 %v217
      %v258 = vunpack.c.l.b16 %v218
      %v259 = vunpack.c.l.b16 %v219
      %v260 = vunpack.c.l.b16 %v220
      %v261 = vunpack.c.l.b16 %v221
      %v262 = vunpack.c.l.b16 %v222
      %v263 = vunpack.c.l.b16 %v223
      %v264 = vunpack.c.l.b16 %v224
      %v265 = vunpack.c.l.b16 %v225
      %v266 = vunpack.c.l.b16 %v226
      %v267 = vpack.c.b16 %v252, %v251
      %v268 = vpack.c.b16 %v254, %v253
      %v269 = vpack.c.b16 %v256, %v255
      %v270 = vpack.c.b16 %v258, %v257
      %v271 = vpack.c.b16 %v260, %v259
      %v272 = vpack.c.b16 %v262, %v261
      %v273 = vpack.c.b16 %v264, %v263
      %v274 = vpack.c.b16 %v266, %v265
      %v278 = vunpack.c.l.b16 %v227
      %v279 = vunpack.c.h.b16 %v227
      %v280 = vunpack.c.l.b16 %v228
      %v281 = vunpack.c.h.b16 %v228
      %v282 = vunpack.c.l.b16 %v229
      %v283 = vunpack.c.h.b16 %v229
      %v284 = vpack.c.b16 %v280, %v278
      %v285 = vpack.c.b16 %v281, %v279
      %v286 = vpack.c.b16 %v282, %v282
      %v287 = vpack.c.b16 %v283, %v283
      %vm290 = vcmask 195584
      %v292 = vsel %vm290, %v267, 0
      %v295 = vsel %vm290, %v268, 0
      %v298 = vsel %vm290, %v269, 0
      %v301 = vsel %vm290, %v270, 0
      %v304 = vsel %vm290, %v271, 0
      %v307 = vsel %vm290, %v272, 0
      %v310 = vsel %vm290, %v273, 0
      %v313 = vsel %vm290, %v274, 0
      %vm315 = vcmask 1043456
      %v317 = vsel %vm315, %v286, 0
      %v320 = vsel %vm315, %v287, 0
      %322 = vmatpush.bf16.msra.mxu0 0
      %323 = vmatpush.bf16.msra.mxu0 0
      %324 = vmatpush.bf16.msra.mxu0 0
      %325 = vmatpush.bf16.msra.mxu0 0
      %326 = vmatpush.bf16.msra.mxu0 0
      %327 = vmatpush.bf16.msra.mxu0 0
      %328 = vmatpush.bf16.msra.mxu0 %v317
      %329 = vmatpush.bf16.msra.mxu0 %v284
      %330 = vmatmul.bf16.gmra.mxu0 %v292
      %v331 = vpop.f32.mrf.mxu0
      %v332 = vadd.f32 %v231, %v331
      %v333 = vpop.f32.mrf.mxu0
      %v334 = vadd.f32 %v231, %v333
      %335 = vmatmul.bf16.gmra.mxu0 %v295
      %v336 = vpop.f32.mrf.mxu0
      %v337 = vadd.f32 %v231, %v336
      %v338 = vpop.f32.mrf.mxu0
      %v339 = vadd.f32 %v231, %v338
      %340 = vmatmul.bf16.gmra.mxu0 %v298
      %v341 = vpop.f32.mrf.mxu0
      %v342 = vadd.f32 %v231, %v341
      %v343 = vpop.f32.mrf.mxu0
      %v344 = vadd.f32 %v231, %v343
      %345 = vmatmul.bf16.gmra.mxu0 %v301
      %v346 = vpop.f32.mrf.mxu0
      %v347 = vadd.f32 %v231, %v346
      %v348 = vpop.f32.mrf.mxu0
      %v349 = vadd.f32 %v231, %v348
      %350 = vmatmul.bf16.gmra.mxu0 %v304
      %v351 = vpop.f32.mrf.mxu0
      %v352 = vadd.f32 %v231, %v351
      %v353 = vpop.f32.mrf.mxu0
      %v354 = vadd.f32 %v231, %v353
      %355 = vmatmul.bf16.gmra.mxu0 %v307
      %v356 = vpop.f32.mrf.mxu0
      %v357 = vadd.f32 %v231, %v356
      %v358 = vpop.f32.mrf.mxu0
      %v359 = vadd.f32 %v231, %v358
      %360 = vmatmul.bf16.gmra.mxu0 %v310
      %v361 = vpop.f32.mrf.mxu0
      %v362 = vadd.f32 %v231, %v361
      %v363 = vpop.f32.mrf.mxu0
      %v364 = vadd.f32 %v231, %v363
      %365 = vmatmul.bf16.gmra.mxu0 %v313
      %v366 = vpop.f32.mrf.mxu0
      %v367 = vadd.f32 %v231, %v366
      %v368 = vpop.f32.mrf.mxu0
      %v369 = vadd.f32 %v231, %v368
      %370 = vdwg.mxu0
      %371 = vmatpush.bf16.msra.mxu0 0
      %372 = vmatpush.bf16.msra.mxu0 0
      %373 = vmatpush.bf16.msra.mxu0 0
      %374 = vmatpush.bf16.msra.mxu0 0
      %375 = vmatpush.bf16.msra.mxu0 0
      %376 = vmatpush.bf16.msra.mxu0 0
      %377 = vmatpush.bf16.msra.mxu0 %v320
      %378 = vmatpush.bf16.msra.mxu0 %v285
      %379 = vmatmul.bf16.gmra.mxu0 %v292
      %v380 = vpop.f32.mrf.mxu0
      %v381 = vadd.f32 %v232, %v380
      %v382 = vpop.f32.mrf.mxu0
      %v383 = vadd.f32 %v232, %v382
      %384 = vmatmul.bf16.gmra.mxu0 %v295
      %v385 = vpop.f32.mrf.mxu0
      %v386 = vadd.f32 %v232, %v385
      %v387 = vpop.f32.mrf.mxu0
      %v388 = vadd.f32 %v232, %v387
      %389 = vmatmul.bf16.gmra.mxu0 %v298
      %v390 = vpop.f32.mrf.mxu0
      %v391 = vadd.f32 %v232, %v390
      %v392 = vpop.f32.mrf.mxu0
      %v393 = vadd.f32 %v232, %v392
      %394 = vmatmul.bf16.gmra.mxu0 %v301
      %v395 = vpop.f32.mrf.mxu0
      %v396 = vadd.f32 %v232, %v395
      %v397 = vpop.f32.mrf.mxu0
      %v398 = vadd.f32 %v232, %v397
      %399 = vmatmul.bf16.gmra.mxu0 %v304
      %v400 = vpop.f32.mrf.mxu0
      %v401 = vadd.f32 %v232, %v400
      %v402 = vpop.f32.mrf.mxu0
      %v403 = vadd.f32 %v232, %v402
      %404 = vmatmul.bf16.gmra.mxu0 %v307
      %v405 = vpop.f32.mrf.mxu0
      %v406 = vadd.f32 %v232, %v405
      %v407 = vpop.f32.mrf.mxu0
      %v408 = vadd.f32 %v232, %v407
      %409 = vmatmul.bf16.gmra.mxu0 %v310
      %v410 = vpop.f32.mrf.mxu0
      %v411 = vadd.f32 %v232, %v410
      %v412 = vpop.f32.mrf.mxu0
      %v413 = vadd.f32 %v232, %v412
      %414 = vmatmul.bf16.gmra.mxu0 %v313
      %v415 = vpop.f32.mrf.mxu0
      %v416 = vadd.f32 %v232, %v415
      %v417 = vpop.f32.mrf.mxu0
      %v418 = vadd.f32 %v232, %v417
      %419 = vdwg.mxu0
      %v420 = vadd.f32 %v332, %v381
      %421 = vadd.xlane.f32.xlu0 %v420
      %v422 = vpop.xlane.xlu0 %421
      %v423 = vadd.f32 %v334, %v383
      %424 = vadd.xlane.f32.xlu0 %v423
      %v425 = vpop.xlane.xlu0 %424
      %v426 = vadd.f32 %v337, %v386
      %427 = vadd.xlane.f32.xlu0 %v426
      %v428 = vpop.xlane.xlu0 %427
      %v429 = vadd.f32 %v339, %v388
      %430 = vadd.xlane.f32.xlu0 %v429
      %v431 = vpop.xlane.xlu0 %430
      %v432 = vadd.f32 %v342, %v391
      %433 = vadd.xlane.f32.xlu0 %v432
      %v434 = vpop.xlane.xlu0 %433
      %v435 = vadd.f32 %v344, %v393
      %436 = vadd.xlane.f32.xlu0 %v435
      %v437 = vpop.xlane.xlu0 %436
      %v438 = vadd.f32 %v347, %v396
      %439 = vadd.xlane.f32.xlu0 %v438
      %v440 = vpop.xlane.xlu0 %439
      %v441 = vadd.f32 %v349, %v398
      %442 = vadd.xlane.f32.xlu0 %v441
      %v443 = vpop.xlane.xlu0 %442
      %v444 = vadd.f32 %v352, %v401
      %445 = vadd.xlane.f32.xlu0 %v444
      %v446 = vpop.xlane.xlu0 %445
      %v447 = vadd.f32 %v354, %v403
      %448 = vadd.xlane.f32.xlu0 %v447
      %v449 = vpop.xlane.xlu0 %448
      %v450 = vadd.f32 %v357, %v406
      %451 = vadd.xlane.f32.xlu0 %v450
      %v452 = vpop.xlane.xlu0 %451
      %v453 = vadd.f32 %v359, %v408
      %454 = vadd.xlane.f32.xlu0 %v453
      %v455 = vpop.xlane.xlu0 %454
      %v456 = vadd.f32 %v362, %v411
      %457 = vadd.xlane.f32.xlu0 %v456
      %v458 = vpop.xlane.xlu0 %457
      %v459 = vadd.f32 %v364, %v413
      %460 = vadd.xlane.f32.xlu0 %v459
      %v461 = vpop.xlane.xlu0 %460
      %v462 = vadd.f32 %v367, %v416
      %463 = vadd.xlane.f32.xlu0 %v462
      %v464 = vpop.xlane.xlu0 %463
      %v465 = vadd.f32 %v369, %v418
      %466 = vadd.xlane.f32.xlu0 %v465
      %v467 = vpop.xlane.xlu0 %466
      %v468 = vmul.f32 %v332, %v332
      %v469 = vmul.f32 %v381, %v381
      %v470 = vmul.f32 %v334, %v334
      %v471 = vmul.f32 %v383, %v383
      %v472 = vmul.f32 %v337, %v337
      %v473 = vmul.f32 %v386, %v386
      %v474 = vmul.f32 %v339, %v339
      %v475 = vmul.f32 %v388, %v388
      %v476 = vmul.f32 %v342, %v342
      %v477 = vmul.f32 %v391, %v391
      %v478 = vmul.f32 %v344, %v344
      %v479 = vmul.f32 %v393, %v393
      %v480 = vmul.f32 %v347, %v347
      %v481 = vmul.f32 %v396, %v396
      %v482 = vmul.f32 %v349, %v349
      %v483 = vmul.f32 %v398, %v398
      %v484 = vmul.f32 %v352, %v352
      %v485 = vmul.f32 %v401, %v401
      %v486 = vmul.f32 %v354, %v354
      %v487 = vmul.f32 %v403, %v403
      %v488 = vmul.f32 %v357, %v357
      %v489 = vmul.f32 %v406, %v406
      %v490 = vmul.f32 %v359, %v359
      %v491 = vmul.f32 %v408, %v408
      %v492 = vmul.f32 %v362, %v362
      %v493 = vmul.f32 %v411, %v411
      %v494 = vmul.f32 %v364, %v364
      %v495 = vmul.f32 %v413, %v413
      %v496 = vmul.f32 %v367, %v367
      %v497 = vmul.f32 %v416, %v416
      %v498 = vmul.f32 %v369, %v369
      %v499 = vmul.f32 %v418, %v418
      %v500 = vadd.f32 %v468, %v469
      %501 = vadd.xlane.f32.xlu0 %v500
      %v502 = vpop.xlane.xlu0 %501
      %v503 = vadd.f32 %v470, %v471
      %504 = vadd.xlane.f32.xlu0 %v503
      %v505 = vpop.xlane.xlu0 %504
      %v506 = vadd.f32 %v472, %v473
      %507 = vadd.xlane.f32.xlu0 %v506
      %v508 = vpop.xlane.xlu0 %507
      %v509 = vadd.f32 %v474, %v475
      %510 = vadd.xlane.f32.xlu0 %v509
      %v511 = vpop.xlane.xlu0 %510
      %v512 = vadd.f32 %v476, %v477
      %513 = vadd.xlane.f32.xlu0 %v512
      %v514 = vpop.xlane.xlu0 %513
      %v515 = vadd.f32 %v478, %v479
      %516 = vadd.xlane.f32.xlu0 %v515
      %v517 = vpop.xlane.xlu0 %516
      %v518 = vadd.f32 %v480, %v481
      %519 = vadd.xlane.f32.xlu0 %v518
      %v520 = vpop.xlane.xlu0 %519
      %v521 = vadd.f32 %v482, %v483
      %522 = vadd.xlane.f32.xlu0 %v521
      %v523 = vpop.xlane.xlu0 %522
      %v524 = vadd.f32 %v484, %v485
      %525 = vadd.xlane.f32.xlu0 %v524
      %v526 = vpop.xlane.xlu0 %525
      %v527 = vadd.f32 %v486, %v487
      %528 = vadd.xlane.f32.xlu0 %v527
      %v529 = vpop.xlane.xlu0 %528
      %v530 = vadd.f32 %v488, %v489
      %531 = vadd.xlane.f32.xlu0 %v530
      %v532 = vpop.xlane.xlu0 %531
      %v533 = vadd.f32 %v490, %v491
      %534 = vadd.xlane.f32.xlu0 %v533
      %v535 = vpop.xlane.xlu0 %534
      %v536 = vadd.f32 %v492, %v493
      %537 = vadd.xlane.f32.xlu0 %v536
      %v538 = vpop.xlane.xlu0 %537
      %v539 = vadd.f32 %v494, %v495
      %540 = vadd.xlane.f32.xlu0 %v539
      %v541 = vpop.xlane.xlu0 %540
      %v542 = vadd.f32 %v496, %v497
      %543 = vadd.xlane.f32.xlu0 %v542
      %v544 = vpop.xlane.xlu0 %543
      %v545 = vadd.f32 %v498, %v499
      %546 = vadd.xlane.f32.xlu0 %v545
      %v547 = vpop.xlane.xlu0 %546
      %v548 = vmul.f32 %v422, 0.00390625
      %v549 = vmul.f32 %v425, 0.00390625
      %v550 = vmul.f32 %v428, 0.00390625
      %v551 = vmul.f32 %v431, 0.00390625
      %v552 = vmul.f32 %v434, 0.00390625
      %v553 = vmul.f32 %v437, 0.00390625
      %v554 = vmul.f32 %v440, 0.00390625
      %v555 = vmul.f32 %v443, 0.00390625
      %v556 = vmul.f32 %v446, 0.00390625
      %v557 = vmul.f32 %v449, 0.00390625
      %v558 = vmul.f32 %v452, 0.00390625
      %v559 = vmul.f32 %v455, 0.00390625
      %v560 = vmul.f32 %v458, 0.00390625
      %v561 = vmul.f32 %v461, 0.00390625
      %v562 = vmul.f32 %v464, 0.00390625
      %v563 = vmul.f32 %v467, 0.00390625
      %v564 = vmul.f32 %v502, 0.00390625
      %v565 = vmul.f32 %v505, 0.00390625
      %v566 = vmul.f32 %v508, 0.00390625
      %v567 = vmul.f32 %v511, 0.00390625
      %v568 = vmul.f32 %v514, 0.00390625
      %v569 = vmul.f32 %v517, 0.00390625
      %v570 = vmul.f32 %v520, 0.00390625
      %v571 = vmul.f32 %v523, 0.00390625
      %v572 = vmul.f32 %v526, 0.00390625
      %v573 = vmul.f32 %v529, 0.00390625
      %v574 = vmul.f32 %v532, 0.00390625
      %v575 = vmul.f32 %v535, 0.00390625
      %v576 = vmul.f32 %v538, 0.00390625
      %v577 = vmul.f32 %v541, 0.00390625
      %v578 = vmul.f32 %v544, 0.00390625
      %v579 = vmul.f32 %v547, 0.00390625
      %v580 = vmul.f32 %v548, %v548
      %v581 = vmul.f32 %v549, %v549
      %v582 = vmul.f32 %v550, %v550
      %v583 = vmul.f32 %v551, %v551
      %v584 = vmul.f32 %v552, %v552
      %v585 = vmul.f32 %v553, %v553
      %v586 = vmul.f32 %v554, %v554
      %v587 = vmul.f32 %v555, %v555
      %v588 = vmul.f32 %v556, %v556
      %v589 = vmul.f32 %v557, %v557
      %v590 = vmul.f32 %v558, %v558
      %v591 = vmul.f32 %v559, %v559
      %v592 = vmul.f32 %v560, %v560
      %v593 = vmul.f32 %v561, %v561
      %v594 = vmul.f32 %v562, %v562
      %v595 = vmul.f32 %v563, %v563
      %v596 = vsub.f32 %v564, %v580
      %v597 = vsub.f32 %v565, %v581
      %v598 = vsub.f32 %v566, %v582
      %v599 = vsub.f32 %v567, %v583
      %v600 = vsub.f32 %v568, %v584
      %v601 = vsub.f32 %v569, %v585
      %v602 = vsub.f32 %v570, %v586
      %v603 = vsub.f32 %v571, %v587
      %v604 = vsub.f32 %v572, %v588
      %v605 = vsub.f32 %v573, %v589
      %v606 = vsub.f32 %v574, %v590
      %v607 = vsub.f32 %v575, %v591
      %v608 = vsub.f32 %v576, %v592
      %v609 = vsub.f32 %v577, %v593
      %v610 = vsub.f32 %v578, %v594
      %v611 = vsub.f32 %v579, %v595
      %v612 = vmax.f32 %v596, 0.0
      %v613 = vmax.f32 %v597, 0.0
      %v614 = vmax.f32 %v598, 0.0
      %v615 = vmax.f32 %v599, 0.0
      %v616 = vmax.f32 %v600, 0.0
      %v617 = vmax.f32 %v601, 0.0
      %v618 = vmax.f32 %v602, 0.0
      %v619 = vmax.f32 %v603, 0.0
      %v620 = vmax.f32 %v604, 0.0
      %v621 = vmax.f32 %v605, 0.0
      %v622 = vmax.f32 %v606, 0.0
      %v623 = vmax.f32 %v607, 0.0
      %v624 = vmax.f32 %v608, 0.0
      %v625 = vmax.f32 %v609, 0.0
      %v626 = vmax.f32 %v610, 0.0
      %v627 = vmax.f32 %v611, 0.0
      %v628 = vsub.f32 %v332, %v548
      %v629 = vsub.f32 %v381, %v548
      %v630 = vsub.f32 %v334, %v549
      %v631 = vsub.f32 %v383, %v549
      %v632 = vsub.f32 %v337, %v550
      %v633 = vsub.f32 %v386, %v550
      %v634 = vsub.f32 %v339, %v551
      %v635 = vsub.f32 %v388, %v551
      %v636 = vsub.f32 %v342, %v552
      %v637 = vsub.f32 %v391, %v552
      %v638 = vsub.f32 %v344, %v553
      %v639 = vsub.f32 %v393, %v553
      %v640 = vsub.f32 %v347, %v554
      %v641 = vsub.f32 %v396, %v554
      %v642 = vsub.f32 %v349, %v555
      %v643 = vsub.f32 %v398, %v555
      %v644 = vsub.f32 %v352, %v556
      %v645 = vsub.f32 %v401, %v556
      %v646 = vsub.f32 %v354, %v557
      %v647 = vsub.f32 %v403, %v557
      %v648 = vsub.f32 %v357, %v558
      %v649 = vsub.f32 %v406, %v558
      %v650 = vsub.f32 %v359, %v559
      %v651 = vsub.f32 %v408, %v559
      %v652 = vsub.f32 %v362, %v560
      %v653 = vsub.f32 %v411, %v560
      %v654 = vsub.f32 %v364, %v561
      %v655 = vsub.f32 %v413, %v561
      %v656 = vsub.f32 %v367, %v562
      %v657 = vsub.f32 %v416, %v562
      %v658 = vsub.f32 %v369, %v563
      %v659 = vsub.f32 %v418, %v563
      %v660 = vadd.f32 %v612, 1e-05
      %v661 = vadd.f32 %v613, 1e-05
      %v662 = vadd.f32 %v614, 1e-05
      %v663 = vadd.f32 %v615, 1e-05
      %v664 = vadd.f32 %v616, 1e-05
      %v665 = vadd.f32 %v617, 1e-05
      %v666 = vadd.f32 %v618, 1e-05
      %v667 = vadd.f32 %v619, 1e-05
      %v668 = vadd.f32 %v620, 1e-05
      %v669 = vadd.f32 %v621, 1e-05
      %v670 = vadd.f32 %v622, 1e-05
      %v671 = vadd.f32 %v623, 1e-05
      %v672 = vadd.f32 %v624, 1e-05
      %v673 = vadd.f32 %v625, 1e-05
      %v674 = vadd.f32 %v626, 1e-05
      %v675 = vadd.f32 %v627, 1e-05
      %v676 = vrsqrt.pop %v660
      %v677 = vmul.f32 %v676, %v660
      %v678 = vmul.f32 %v677, %v676
      %v679 = vmul.f32 0.5, %v678
      %v680 = vsub.f32 1.5, %v679
      %v681 = vmul.f32 %v676, %v680
      %vm682 = vweird.f32 %v660
      %vm683 = vweird.f32 %v676
      %vm684 = vmor %vm682, %vm683
      %v685 = vsel %vm684, %v676, %v681
      %v686 = vrsqrt.pop %v661
      %v687 = vmul.f32 %v686, %v661
      %v688 = vmul.f32 %v687, %v686
      %v689 = vmul.f32 0.5, %v688
      %v690 = vsub.f32 1.5, %v689
      %v691 = vmul.f32 %v686, %v690
      %vm692 = vweird.f32 %v661
      %vm693 = vweird.f32 %v686
      %vm694 = vmor %vm692, %vm693
      %v695 = vsel %vm694, %v686, %v691
      %v696 = vrsqrt.pop %v662
      %v697 = vmul.f32 %v696, %v662
      %v698 = vmul.f32 %v697, %v696
      %v699 = vmul.f32 0.5, %v698
      %v700 = vsub.f32 1.5, %v699
      %v701 = vmul.f32 %v696, %v700
      %vm702 = vweird.f32 %v662
      %vm703 = vweird.f32 %v696
      %vm704 = vmor %vm702, %vm703
      %v705 = vsel %vm704, %v696, %v701
      %v706 = vrsqrt.pop %v663
      %v707 = vmul.f32 %v706, %v663
      %v708 = vmul.f32 %v707, %v706
      %v709 = vmul.f32 0.5, %v708
      %v710 = vsub.f32 1.5, %v709
      %v711 = vmul.f32 %v706, %v710
      %vm712 = vweird.f32 %v663
      %vm713 = vweird.f32 %v706
      %vm714 = vmor %vm712, %vm713
      %v715 = vsel %vm714, %v706, %v711
      %v716 = vrsqrt.pop %v664
      %v717 = vmul.f32 %v716, %v664
      %v718 = vmul.f32 %v717, %v716
      %v719 = vmul.f32 0.5, %v718
      %v720 = vsub.f32 1.5, %v719
      %v721 = vmul.f32 %v716, %v720
      %vm722 = vweird.f32 %v664
      %vm723 = vweird.f32 %v716
      %vm724 = vmor %vm722, %vm723
      %v725 = vsel %vm724, %v716, %v721
      %v726 = vrsqrt.pop %v665
      %v727 = vmul.f32 %v726, %v665
      %v728 = vmul.f32 %v727, %v726
      %v729 = vmul.f32 0.5, %v728
      %v730 = vsub.f32 1.5, %v729
      %v731 = vmul.f32 %v726, %v730
      %vm732 = vweird.f32 %v665
      %vm733 = vweird.f32 %v726
      %vm734 = vmor %vm732, %vm733
      %v735 = vsel %vm734, %v726, %v731
      %v736 = vrsqrt.pop %v666
      %v737 = vmul.f32 %v736, %v666
      %v738 = vmul.f32 %v737, %v736
      %v739 = vmul.f32 0.5, %v738
      %v740 = vsub.f32 1.5, %v739
      %v741 = vmul.f32 %v736, %v740
      %vm742 = vweird.f32 %v666
      %vm743 = vweird.f32 %v736
      %vm744 = vmor %vm742, %vm743
      %v745 = vsel %vm744, %v736, %v741
      %v746 = vrsqrt.pop %v667
      %v747 = vmul.f32 %v746, %v667
      %v748 = vmul.f32 %v747, %v746
      %v749 = vmul.f32 0.5, %v748
      %v750 = vsub.f32 1.5, %v749
      %v751 = vmul.f32 %v746, %v750
      %vm752 = vweird.f32 %v667
      %vm753 = vweird.f32 %v746
      %vm754 = vmor %vm752, %vm753
      %v755 = vsel %vm754, %v746, %v751
      %v756 = vrsqrt.pop %v668
      %v757 = vmul.f32 %v756, %v668
      %v758 = vmul.f32 %v757, %v756
      %v759 = vmul.f32 0.5, %v758
      %v760 = vsub.f32 1.5, %v759
      %v761 = vmul.f32 %v756, %v760
      %vm762 = vweird.f32 %v668
      %vm763 = vweird.f32 %v756
      %vm764 = vmor %vm762, %vm763
      %v765 = vsel %vm764, %v756, %v761
      %v766 = vrsqrt.pop %v669
      %v767 = vmul.f32 %v766, %v669
      %v768 = vmul.f32 %v767, %v766
      %v769 = vmul.f32 0.5, %v768
      %v770 = vsub.f32 1.5, %v769
      %v771 = vmul.f32 %v766, %v770
      %vm772 = vweird.f32 %v669
      %vm773 = vweird.f32 %v766
      %vm774 = vmor %vm772, %vm773
      %v775 = vsel %vm774, %v766, %v771
      %v776 = vrsqrt.pop %v670
      %v777 = vmul.f32 %v776, %v670
      %v778 = vmul.f32 %v777, %v776
      %v779 = vmul.f32 0.5, %v778
      %v780 = vsub.f32 1.5, %v779
      %v781 = vmul.f32 %v776, %v780
      %vm782 = vweird.f32 %v670
      %vm783 = vweird.f32 %v776
      %vm784 = vmor %vm782, %vm783
      %v785 = vsel %vm784, %v776, %v781
      %v786 = vrsqrt.pop %v671
      %v787 = vmul.f32 %v786, %v671
      %v788 = vmul.f32 %v787, %v786
      %v789 = vmul.f32 0.5, %v788
      %v790 = vsub.f32 1.5, %v789
      %v791 = vmul.f32 %v786, %v790
      %vm792 = vweird.f32 %v671
      %vm793 = vweird.f32 %v786
      %vm794 = vmor %vm792, %vm793
      %v795 = vsel %vm794, %v786, %v791
      %v796 = vrsqrt.pop %v672
      %v797 = vmul.f32 %v796, %v672
      %v798 = vmul.f32 %v797, %v796
      %v799 = vmul.f32 0.5, %v798
      %v800 = vsub.f32 1.5, %v799
      %v801 = vmul.f32 %v796, %v800
      %vm802 = vweird.f32 %v672
      %vm803 = vweird.f32 %v796
      %vm804 = vmor %vm802, %vm803
      %v805 = vsel %vm804, %v796, %v801
      %v806 = vrsqrt.pop %v673
      %v807 = vmul.f32 %v806, %v673
      %v808 = vmul.f32 %v807, %v806
      %v809 = vmul.f32 0.5, %v808
      %v810 = vsub.f32 1.5, %v809
      %v811 = vmul.f32 %v806, %v810
      %vm812 = vweird.f32 %v673
      %vm813 = vweird.f32 %v806
      %vm814 = vmor %vm812, %vm813
      %v815 = vsel %vm814, %v806, %v811
      %v816 = vrsqrt.pop %v674
      %v817 = vmul.f32 %v816, %v674
      %v818 = vmul.f32 %v817, %v816
      %v819 = vmul.f32 0.5, %v818
      %v820 = vsub.f32 1.5, %v819
      %v821 = vmul.f32 %v816, %v820
      %vm822 = vweird.f32 %v674
      %vm823 = vweird.f32 %v816
      %vm824 = vmor %vm822, %vm823
      %v825 = vsel %vm824, %v816, %v821
      %v826 = vrsqrt.pop %v675
      %v827 = vmul.f32 %v826, %v675
      %v828 = vmul.f32 %v827, %v826
      %v829 = vmul.f32 0.5, %v828
      %v830 = vsub.f32 1.5, %v829
      %v831 = vmul.f32 %v826, %v830
      %vm832 = vweird.f32 %v675
      %vm833 = vweird.f32 %v826
      %vm834 = vmor %vm832, %vm833
      %v835 = vsel %vm834, %v826, %v831
      %v836 = vmul.f32 %v628, %v685
      %v837 = vmul.f32 %v629, %v685
      %v838 = vmul.f32 %v630, %v695
      %v839 = vmul.f32 %v631, %v695
      %v840 = vmul.f32 %v632, %v705
      %v841 = vmul.f32 %v633, %v705
      %v842 = vmul.f32 %v634, %v715
      %v843 = vmul.f32 %v635, %v715
      %v844 = vmul.f32 %v636, %v725
      %v845 = vmul.f32 %v637, %v725
      %v846 = vmul.f32 %v638, %v735
      %v847 = vmul.f32 %v639, %v735
      %v848 = vmul.f32 %v640, %v745
      %v849 = vmul.f32 %v641, %v745
      %v850 = vmul.f32 %v642, %v755
      %v851 = vmul.f32 %v643, %v755
      %v852 = vmul.f32 %v644, %v765
      %v853 = vmul.f32 %v645, %v765
      %v854 = vmul.f32 %v646, %v775
      %v855 = vmul.f32 %v647, %v775
      %v856 = vmul.f32 %v648, %v785
      %v857 = vmul.f32 %v649, %v785
      %v858 = vmul.f32 %v650, %v795
      %v859 = vmul.f32 %v651, %v795
      %v860 = vmul.f32 %v652, %v805
      %v861 = vmul.f32 %v653, %v805
      %v862 = vmul.f32 %v654, %v815
      %v863 = vmul.f32 %v655, %v815
      %v864 = vmul.f32 %v656, %v825
      %v865 = vmul.f32 %v657, %v825
      %v866 = vmul.f32 %v658, %v835
      %v867 = vmul.f32 %v659, %v835
      %v869 = vperm.slane %v199, 0
      %v870 = vperm.slane %v199, 1
      %v873 = vmul.f32 %v836, %v869
      %v874 = vmul.f32 %v837, %v870
      %v875 = vmul.f32 %v838, %v869
      %v876 = vmul.f32 %v839, %v870
      %v877 = vmul.f32 %v840, %v869
      %v878 = vmul.f32 %v841, %v870
      %v879 = vmul.f32 %v842, %v869
      %v880 = vmul.f32 %v843, %v870
      %v881 = vmul.f32 %v844, %v869
      %v882 = vmul.f32 %v845, %v870
      %v883 = vmul.f32 %v846, %v869
      %v884 = vmul.f32 %v847, %v870
      %v885 = vmul.f32 %v848, %v869
      %v886 = vmul.f32 %v849, %v870
      %v887 = vmul.f32 %v850, %v869
      %v888 = vmul.f32 %v851, %v870
      %v889 = vmul.f32 %v852, %v869
      %v890 = vmul.f32 %v853, %v870
      %v891 = vmul.f32 %v854, %v869
      %v892 = vmul.f32 %v855, %v870
      %v893 = vmul.f32 %v856, %v869
      %v894 = vmul.f32 %v857, %v870
      %v895 = vmul.f32 %v858, %v869
      %v896 = vmul.f32 %v859, %v870
      %v897 = vmul.f32 %v860, %v869
      %v898 = vmul.f32 %v861, %v870
      %v899 = vmul.f32 %v862, %v869
      %v900 = vmul.f32 %v863, %v870
      %v901 = vmul.f32 %v864, %v869
      %v902 = vmul.f32 %v865, %v870
      %v903 = vmul.f32 %v866, %v869
      %v904 = vmul.f32 %v867, %v870
      %v906 = vperm.slane %v201, 0
      %v907 = vperm.slane %v201, 1
      %v910 = vadd.f32 %v873, %v906
      %v911 = vadd.f32 %v874, %v907
      %v912 = vadd.f32 %v875, %v906
      %v913 = vadd.f32 %v876, %v907
      %v914 = vadd.f32 %v877, %v906
      %v915 = vadd.f32 %v878, %v907
      %v916 = vadd.f32 %v879, %v906
      %v917 = vadd.f32 %v880, %v907
      %v918 = vadd.f32 %v881, %v906
      %v919 = vadd.f32 %v882, %v907
      %v920 = vadd.f32 %v883, %v906
      %v921 = vadd.f32 %v884, %v907
      %v922 = vadd.f32 %v885, %v906
      %v923 = vadd.f32 %v886, %v907
      %v924 = vadd.f32 %v887, %v906
      %v925 = vadd.f32 %v888, %v907
      %v926 = vadd.f32 %v889, %v906
      %v927 = vadd.f32 %v890, %v907
      %v928 = vadd.f32 %v891, %v906
      %v929 = vadd.f32 %v892, %v907
      %v930 = vadd.f32 %v893, %v906
      %v931 = vadd.f32 %v894, %v907
      %v932 = vadd.f32 %v895, %v906
      %v933 = vadd.f32 %v896, %v907
      %v934 = vadd.f32 %v897, %v906
      %v935 = vadd.f32 %v898, %v907
      %v936 = vadd.f32 %v899, %v906
      %v937 = vadd.f32 %v900, %v907
      %v938 = vadd.f32 %v901, %v906
      %v939 = vadd.f32 %v902, %v907
      %v940 = vadd.f32 %v903, %v906
      %v941 = vadd.f32 %v904, %v907
      %v942 = vmax.f32 %v910, 0.0
      %v943 = vmax.f32 %v911, 0.0
      %v944 = vmax.f32 %v912, 0.0
      %v945 = vmax.f32 %v913, 0.0
      %v946 = vmax.f32 %v914, 0.0
      %v947 = vmax.f32 %v915, 0.0
      %v948 = vmax.f32 %v916, 0.0
      %v949 = vmax.f32 %v917, 0.0
      %v950 = vmax.f32 %v918, 0.0
      %v951 = vmax.f32 %v919, 0.0
      %v952 = vmax.f32 %v920, 0.0
      %v953 = vmax.f32 %v921, 0.0
      %v954 = vmax.f32 %v922, 0.0
      %v955 = vmax.f32 %v923, 0.0
      %v956 = vmax.f32 %v924, 0.0
      %v957 = vmax.f32 %v925, 0.0
      %v958 = vmax.f32 %v926, 0.0
      %v959 = vmax.f32 %v927, 0.0
      %v960 = vmax.f32 %v928, 0.0
      %v961 = vmax.f32 %v929, 0.0
      %v962 = vmax.f32 %v930, 0.0
      %v963 = vmax.f32 %v931, 0.0
      %v964 = vmax.f32 %v932, 0.0
      %v965 = vmax.f32 %v933, 0.0
      %v966 = vmax.f32 %v934, 0.0
      %v967 = vmax.f32 %v935, 0.0
      %v968 = vmax.f32 %v936, 0.0
      %v969 = vmax.f32 %v937, 0.0
      %v970 = vmax.f32 %v938, 0.0
      %v971 = vmax.f32 %v939, 0.0
      %v972 = vmax.f32 %v940, 0.0
      %v973 = vmax.f32 %v941, 0.0
      %v974 = vpack.c.bf16 %v944, %v942
      %v975 = vpack.c.bf16 %v945, %v943
      %v976 = vpack.c.bf16 %v948, %v946
      %v977 = vpack.c.bf16 %v949, %v947
      %v978 = vpack.c.bf16 %v952, %v950
      %v979 = vpack.c.bf16 %v953, %v951
      %v980 = vpack.c.bf16 %v956, %v954
      %v981 = vpack.c.bf16 %v957, %v955
      %v982 = vpack.c.bf16 %v960, %v958
      %v983 = vpack.c.bf16 %v961, %v959
      %v984 = vpack.c.bf16 %v964, %v962
      %v985 = vpack.c.bf16 %v965, %v963
      %v986 = vpack.c.bf16 %v968, %v966
      %v987 = vpack.c.bf16 %v969, %v967
      %v988 = vpack.c.bf16 %v972, %v970
      %v989 = vpack.c.bf16 %v973, %v971
      %v990 = vld [vmem:[%s2] sm:$0xff]
      %v991 = vld [vmem:[%s2 + $0x8] sm:$0xff]
      %v992 = vld [vmem:[%s2 + $0x10] sm:$0xff]
      %v993 = vld [vmem:[%s2 + $0x18] sm:$0xff]
      %v994 = vld [vmem:[%s2 + $0x20] sm:$0xff]
      %v995 = vld [vmem:[%s2 + $0x28] sm:$0xff]
      %v996 = vld [vmem:[%s2 + $0x30] sm:$0xff]
      %v997 = vld [vmem:[%s2 + $0x38] sm:$0xff]
      %v998 = vld [vmem:[%s2 + $0x40] sm:$0xff]
      %v999 = vld [vmem:[%s2 + $0x48] sm:$0xff]
      %v1000 = vld [vmem:[%s2 + $0x50] sm:$0xff]
      %v1001 = vld [vmem:[%s2 + $0x58] sm:$0xff]
      %v1002 = vld [vmem:[%s2 + $0x60] sm:$0xff]
      %v1003 = vld [vmem:[%s2 + $0x68] sm:$0xff]
      %v1004 = vld [vmem:[%s2 + $0x70] sm:$0xff]
      %v1005 = vld [vmem:[%s2 + $0x78] sm:$0xff]
      %v1006 = vld [vmem:[%s2 + $0x80] sm:$0xff]
      %v1007 = vld [vmem:[%s2 + $0x88] sm:$0xff]
      %v1008 = vld [vmem:[%s2 + $0x90] sm:$0xff]
      %v1009 = vld [vmem:[%s2 + $0x98] sm:$0xff]
      %v1010 = vld [vmem:[%s2 + $0xa0] sm:$0xff]
      %v1011 = vld [vmem:[%s2 + $0xa8] sm:$0xff]
      %v1012 = vld [vmem:[%s2 + $0xb0] sm:$0xff]
      %v1013 = vld [vmem:[%s2 + $0xb8] sm:$0xff]
      %v1014 = vld [vmem:[%s2 + $0xc0] sm:$0xff]
      %v1015 = vld [vmem:[%s2 + $0xc8] sm:$0xff]
      %v1016 = vld [vmem:[%s2 + $0xd0] sm:$0xff]
      %v1017 = vld [vmem:[%s2 + $0xd8] sm:$0xff]
      %v1018 = vld [vmem:[%s2 + $0xe0] sm:$0xff]
      %v1019 = vld [vmem:[%s2 + $0xe8] sm:$0xff]
      %v1020 = vld [vmem:[%s2 + $0xf0] sm:$0xff]
      %v1021 = vld [vmem:[%s2 + $0xf8] sm:$0xff]
      %v1023 = vperm.slane %v203, 0
      %v1024 = vperm.slane %v203, 1
      %v1059 = vunpack.c.l.b16 %v990
      %v1060 = vunpack.c.h.b16 %v990
      %v1061 = vunpack.c.l.b16 %v991
      %v1062 = vunpack.c.h.b16 %v991
      %v1063 = vunpack.c.l.b16 %v992
      %v1064 = vunpack.c.h.b16 %v992
      %v1065 = vunpack.c.l.b16 %v993
      %v1066 = vunpack.c.h.b16 %v993
      %v1067 = vunpack.c.l.b16 %v994
      %v1068 = vunpack.c.h.b16 %v994
      %v1069 = vunpack.c.l.b16 %v995
      %v1070 = vunpack.c.h.b16 %v995
      %v1071 = vunpack.c.l.b16 %v996
      %v1072 = vunpack.c.h.b16 %v996
      %v1073 = vunpack.c.l.b16 %v997
      %v1074 = vunpack.c.h.b16 %v997
      %v1075 = vunpack.c.l.b16 %v998
      %v1076 = vunpack.c.h.b16 %v998
      %v1077 = vunpack.c.l.b16 %v999
      %v1078 = vunpack.c.h.b16 %v999
      %v1079 = vunpack.c.l.b16 %v1000
      %v1080 = vunpack.c.h.b16 %v1000
      %v1081 = vunpack.c.l.b16 %v1001
      %v1082 = vunpack.c.h.b16 %v1001
      %v1083 = vunpack.c.l.b16 %v1002
      %v1084 = vunpack.c.h.b16 %v1002
      %v1085 = vunpack.c.l.b16 %v1003
      %v1086 = vunpack.c.h.b16 %v1003
      %v1087 = vunpack.c.l.b16 %v1004
      %v1088 = vunpack.c.h.b16 %v1004
      %v1089 = vunpack.c.l.b16 %v1005
      %v1090 = vunpack.c.h.b16 %v1005
      %v1091 = vunpack.c.l.b16 %v1006
      %v1092 = vunpack.c.h.b16 %v1006
      %v1093 = vunpack.c.l.b16 %v1007
      %v1094 = vunpack.c.h.b16 %v1007
      %v1095 = vunpack.c.l.b16 %v1008
      %v1096 = vunpack.c.h.b16 %v1008
      %v1097 = vunpack.c.l.b16 %v1009
      %v1098 = vunpack.c.h.b16 %v1009
      %v1099 = vunpack.c.l.b16 %v1010
      %v1100 = vunpack.c.h.b16 %v1010
      %v1101 = vunpack.c.l.b16 %v1011
      %v1102 = vunpack.c.h.b16 %v1011
      %v1103 = vunpack.c.l.b16 %v1012
      %v1104 = vunpack.c.h.b16 %v1012
      %v1105 = vunpack.c.l.b16 %v1013
      %v1106 = vunpack.c.h.b16 %v1013
      %v1107 = vunpack.c.l.b16 %v1014
      %v1108 = vunpack.c.h.b16 %v1014
      %v1109 = vunpack.c.l.b16 %v1015
      %v1110 = vunpack.c.h.b16 %v1015
      %v1111 = vunpack.c.l.b16 %v1016
      %v1112 = vunpack.c.h.b16 %v1016
      %v1113 = vunpack.c.l.b16 %v1017
      %v1114 = vunpack.c.h.b16 %v1017
      %v1115 = vunpack.c.l.b16 %v1018
      %v1116 = vunpack.c.h.b16 %v1018
      %v1117 = vunpack.c.l.b16 %v1019
      %v1118 = vunpack.c.h.b16 %v1019
      %v1119 = vunpack.c.l.b16 %v1020
      %v1120 = vunpack.c.h.b16 %v1020
      %v1121 = vunpack.c.l.b16 %v1021
      %v1122 = vunpack.c.h.b16 %v1021
      %v1123 = vpack.c.b16 %v1061, %v1059
      %v1124 = vpack.c.b16 %v1062, %v1060
      %v1125 = vpack.c.b16 %v1065, %v1063
      %v1126 = vpack.c.b16 %v1066, %v1064
      %v1127 = vpack.c.b16 %v1069, %v1067
      %v1128 = vpack.c.b16 %v1070, %v1068
      %v1129 = vpack.c.b16 %v1073, %v1071
      %v1130 = vpack.c.b16 %v1074, %v1072
      %v1131 = vpack.c.b16 %v1077, %v1075
      %v1132 = vpack.c.b16 %v1078, %v1076
      %v1133 = vpack.c.b16 %v1081, %v1079
      %v1134 = vpack.c.b16 %v1082, %v1080
      %v1135 = vpack.c.b16 %v1085, %v1083
      %v1136 = vpack.c.b16 %v1086, %v1084
      %v1137 = vpack.c.b16 %v1089, %v1087
      %v1138 = vpack.c.b16 %v1090, %v1088
      %v1139 = vpack.c.b16 %v1093, %v1091
      %v1140 = vpack.c.b16 %v1094, %v1092
      %v1141 = vpack.c.b16 %v1097, %v1095
      %v1142 = vpack.c.b16 %v1098, %v1096
      %v1143 = vpack.c.b16 %v1101, %v1099
      %v1144 = vpack.c.b16 %v1102, %v1100
      %v1145 = vpack.c.b16 %v1105, %v1103
      %v1146 = vpack.c.b16 %v1106, %v1104
      %v1147 = vpack.c.b16 %v1109, %v1107
      %v1148 = vpack.c.b16 %v1110, %v1108
      %v1149 = vpack.c.b16 %v1113, %v1111
      %v1150 = vpack.c.b16 %v1114, %v1112
      %v1151 = vpack.c.b16 %v1117, %v1115
      %v1152 = vpack.c.b16 %v1118, %v1116
      %v1153 = vpack.c.b16 %v1121, %v1119
      %v1154 = vpack.c.b16 %v1122, %v1120
      %1187 = vmatpush.bf16.msra.mxu0 %v1137
      %1188 = vmatpush.bf16.msra.mxu0 %v1135
      %1189 = vmatpush.bf16.msra.mxu0 %v1133
      %1190 = vmatpush.bf16.msra.mxu0 %v1131
      %1191 = vmatpush.bf16.msra.mxu0 %v1129
      %1192 = vmatpush.bf16.msra.mxu0 %v1127
      %1193 = vmatpush.bf16.msra.mxu0 %v1125
      %1194 = vmatpush.bf16.msra.mxu0 %v1123
      %1195 = vmatmul.bf16.gmra.mxu0 %v974
      %v1196 = vpop.f32.mrf.mxu0
      %v1197 = vadd.f32 %v1023, %v1196
      %v1198 = vpop.f32.mrf.mxu0
      %v1199 = vadd.f32 %v1023, %v1198
      %1200 = vmatmul.bf16.gmra.mxu0 %v976
      %v1201 = vpop.f32.mrf.mxu0
      %v1202 = vadd.f32 %v1023, %v1201
      %v1203 = vpop.f32.mrf.mxu0
      %v1204 = vadd.f32 %v1023, %v1203
      %1205 = vmatmul.bf16.gmra.mxu0 %v978
      %v1206 = vpop.f32.mrf.mxu0
      %v1207 = vadd.f32 %v1023, %v1206
      %v1208 = vpop.f32.mrf.mxu0
      %v1209 = vadd.f32 %v1023, %v1208
      %1210 = vmatmul.bf16.gmra.mxu0 %v980
      %v1211 = vpop.f32.mrf.mxu0
      %v1212 = vadd.f32 %v1023, %v1211
      %v1213 = vpop.f32.mrf.mxu0
      %v1214 = vadd.f32 %v1023, %v1213
      %1215 = vmatmul.bf16.gmra.mxu0 %v982
      %v1216 = vpop.f32.mrf.mxu0
      %v1217 = vadd.f32 %v1023, %v1216
      %v1218 = vpop.f32.mrf.mxu0
      %v1219 = vadd.f32 %v1023, %v1218
      %1220 = vmatmul.bf16.gmra.mxu0 %v984
      %v1221 = vpop.f32.mrf.mxu0
      %v1222 = vadd.f32 %v1023, %v1221
      %v1223 = vpop.f32.mrf.mxu0
      %v1224 = vadd.f32 %v1023, %v1223
      %1225 = vmatmul.bf16.gmra.mxu0 %v986
      %v1226 = vpop.f32.mrf.mxu0
      %v1227 = vadd.f32 %v1023, %v1226
      %v1228 = vpop.f32.mrf.mxu0
      %v1229 = vadd.f32 %v1023, %v1228
      %1230 = vmatmul.bf16.gmra.mxu0 %v988
      %v1231 = vpop.f32.mrf.mxu0
      %v1232 = vadd.f32 %v1023, %v1231
      %v1233 = vpop.f32.mrf.mxu0
      %v1234 = vadd.f32 %v1023, %v1233
      %1235 = vdwg.mxu0
      %1236 = vmatpush.bf16.msra.mxu0 %v1153
      %1237 = vmatpush.bf16.msra.mxu0 %v1151
      %1238 = vmatpush.bf16.msra.mxu0 %v1149
      %1239 = vmatpush.bf16.msra.mxu0 %v1147
      %1240 = vmatpush.bf16.msra.mxu0 %v1145
      %1241 = vmatpush.bf16.msra.mxu0 %v1143
      %1242 = vmatpush.bf16.msra.mxu0 %v1141
      %1243 = vmatpush.bf16.msra.mxu0 %v1139
      %1244 = vmatmul.bf16.gmra.mxu0 %v975
      %v1245 = vpop.f32.mrf.mxu0
      %v1246 = vadd.f32 %v1197, %v1245
      %v1247 = vpop.f32.mrf.mxu0
      %v1248 = vadd.f32 %v1199, %v1247
      %1249 = vmatmul.bf16.gmra.mxu0 %v977
      %v1250 = vpop.f32.mrf.mxu0
      %v1251 = vadd.f32 %v1202, %v1250
      %v1252 = vpop.f32.mrf.mxu0
      %v1253 = vadd.f32 %v1204, %v1252
      %1254 = vmatmul.bf16.gmra.mxu0 %v979
      %v1255 = vpop.f32.mrf.mxu0
      %v1256 = vadd.f32 %v1207, %v1255
      %v1257 = vpop.f32.mrf.mxu0
      %v1258 = vadd.f32 %v1209, %v1257
      %1259 = vmatmul.bf16.gmra.mxu0 %v981
      %v1260 = vpop.f32.mrf.mxu0
      %v1261 = vadd.f32 %v1212, %v1260
      %v1262 = vpop.f32.mrf.mxu0
      %v1263 = vadd.f32 %v1214, %v1262
      %1264 = vmatmul.bf16.gmra.mxu0 %v983
      %v1265 = vpop.f32.mrf.mxu0
      %v1266 = vadd.f32 %v1217, %v1265
      %v1267 = vpop.f32.mrf.mxu0
      %v1268 = vadd.f32 %v1219, %v1267
      %1269 = vmatmul.bf16.gmra.mxu0 %v985
      %v1270 = vpop.f32.mrf.mxu0
      %v1271 = vadd.f32 %v1222, %v1270
      %v1272 = vpop.f32.mrf.mxu0
      %v1273 = vadd.f32 %v1224, %v1272
      %1274 = vmatmul.bf16.gmra.mxu0 %v987
      %v1275 = vpop.f32.mrf.mxu0
      %v1276 = vadd.f32 %v1227, %v1275
      %v1277 = vpop.f32.mrf.mxu0
      %v1278 = vadd.f32 %v1229, %v1277
      %1279 = vmatmul.bf16.gmra.mxu0 %v989
      %v1280 = vpop.f32.mrf.mxu0
      %v1281 = vadd.f32 %v1232, %v1280
      %v1282 = vpop.f32.mrf.mxu0
      %v1283 = vadd.f32 %v1234, %v1282
      %1284 = vdwg.mxu0
      %1285 = vmatpush.bf16.msra.mxu0 %v1138
      %1286 = vmatpush.bf16.msra.mxu0 %v1136
      %1287 = vmatpush.bf16.msra.mxu0 %v1134
      %1288 = vmatpush.bf16.msra.mxu0 %v1132
      %1289 = vmatpush.bf16.msra.mxu0 %v1130
      %1290 = vmatpush.bf16.msra.mxu0 %v1128
      %1291 = vmatpush.bf16.msra.mxu0 %v1126
      %1292 = vmatpush.bf16.msra.mxu0 %v1124
      %1293 = vmatmul.bf16.gmra.mxu0 %v974
      %v1294 = vpop.f32.mrf.mxu0
      %v1295 = vadd.f32 %v1024, %v1294
      %v1296 = vpop.f32.mrf.mxu0
      %v1297 = vadd.f32 %v1024, %v1296
      %1298 = vmatmul.bf16.gmra.mxu0 %v976
      %v1299 = vpop.f32.mrf.mxu0
      %v1300 = vadd.f32 %v1024, %v1299
      %v1301 = vpop.f32.mrf.mxu0
      %v1302 = vadd.f32 %v1024, %v1301
      %1303 = vmatmul.bf16.gmra.mxu0 %v978
      %v1304 = vpop.f32.mrf.mxu0
      %v1305 = vadd.f32 %v1024, %v1304
      %v1306 = vpop.f32.mrf.mxu0
      %v1307 = vadd.f32 %v1024, %v1306
      %1308 = vmatmul.bf16.gmra.mxu0 %v980
      %v1309 = vpop.f32.mrf.mxu0
      %v1310 = vadd.f32 %v1024, %v1309
      %v1311 = vpop.f32.mrf.mxu0
      %v1312 = vadd.f32 %v1024, %v1311
      %1313 = vmatmul.bf16.gmra.mxu0 %v982
      %v1314 = vpop.f32.mrf.mxu0
      %v1315 = vadd.f32 %v1024, %v1314
      %v1316 = vpop.f32.mrf.mxu0
      %v1317 = vadd.f32 %v1024, %v1316
      %1318 = vmatmul.bf16.gmra.mxu0 %v984
      %v1319 = vpop.f32.mrf.mxu0
      %v1320 = vadd.f32 %v1024, %v1319
      %v1321 = vpop.f32.mrf.mxu0
      %v1322 = vadd.f32 %v1024, %v1321
      %1323 = vmatmul.bf16.gmra.mxu0 %v986
      %v1324 = vpop.f32.mrf.mxu0
      %v1325 = vadd.f32 %v1024, %v1324
      %v1326 = vpop.f32.mrf.mxu0
      %v1327 = vadd.f32 %v1024, %v1326
      %1328 = vmatmul.bf16.gmra.mxu0 %v988
      %v1329 = vpop.f32.mrf.mxu0
      %v1330 = vadd.f32 %v1024, %v1329
      %v1331 = vpop.f32.mrf.mxu0
      %v1332 = vadd.f32 %v1024, %v1331
      %1333 = vdwg.mxu0
      %1334 = vmatpush.bf16.msra.mxu0 %v1154
      %1335 = vmatpush.bf16.msra.mxu0 %v1152
      %1336 = vmatpush.bf16.msra.mxu0 %v1150
      %1337 = vmatpush.bf16.msra.mxu0 %v1148
      %1338 = vmatpush.bf16.msra.mxu0 %v1146
      %1339 = vmatpush.bf16.msra.mxu0 %v1144
      %1340 = vmatpush.bf16.msra.mxu0 %v1142
      %1341 = vmatpush.bf16.msra.mxu0 %v1140
      %1342 = vmatmul.bf16.gmra.mxu0 %v975
      %v1343 = vpop.f32.mrf.mxu0
      %v1344 = vadd.f32 %v1295, %v1343
      %v1345 = vpop.f32.mrf.mxu0
      %v1346 = vadd.f32 %v1297, %v1345
      %1347 = vmatmul.bf16.gmra.mxu0 %v977
      %v1348 = vpop.f32.mrf.mxu0
      %v1349 = vadd.f32 %v1300, %v1348
      %v1350 = vpop.f32.mrf.mxu0
      %v1351 = vadd.f32 %v1302, %v1350
      %1352 = vmatmul.bf16.gmra.mxu0 %v979
      %v1353 = vpop.f32.mrf.mxu0
      %v1354 = vadd.f32 %v1305, %v1353
      %v1355 = vpop.f32.mrf.mxu0
      %v1356 = vadd.f32 %v1307, %v1355
      %1357 = vmatmul.bf16.gmra.mxu0 %v981
      %v1358 = vpop.f32.mrf.mxu0
      %v1359 = vadd.f32 %v1310, %v1358
      %v1360 = vpop.f32.mrf.mxu0
      %v1361 = vadd.f32 %v1312, %v1360
      %1362 = vmatmul.bf16.gmra.mxu0 %v983
      %v1363 = vpop.f32.mrf.mxu0
      %v1364 = vadd.f32 %v1315, %v1363
      %v1365 = vpop.f32.mrf.mxu0
      %v1366 = vadd.f32 %v1317, %v1365
      %1367 = vmatmul.bf16.gmra.mxu0 %v985
      %v1368 = vpop.f32.mrf.mxu0
      %v1369 = vadd.f32 %v1320, %v1368
      %v1370 = vpop.f32.mrf.mxu0
      %v1371 = vadd.f32 %v1322, %v1370
      %1372 = vmatmul.bf16.gmra.mxu0 %v987
      %v1373 = vpop.f32.mrf.mxu0
      %v1374 = vadd.f32 %v1325, %v1373
      %v1375 = vpop.f32.mrf.mxu0
      %v1376 = vadd.f32 %v1327, %v1375
      %1377 = vmatmul.bf16.gmra.mxu0 %v989
      %v1378 = vpop.f32.mrf.mxu0
      %v1379 = vadd.f32 %v1330, %v1378
      %v1380 = vpop.f32.mrf.mxu0
      %v1381 = vadd.f32 %v1332, %v1380
      %1382 = vdwg.mxu0
      %v1383 = vadd.f32 %v1246, %v1344
      %1384 = vadd.xlane.f32.xlu0 %v1383
      %v1385 = vpop.xlane.xlu0 %1384
      %v1386 = vadd.f32 %v1248, %v1346
      %1387 = vadd.xlane.f32.xlu0 %v1386
      %v1388 = vpop.xlane.xlu0 %1387
      %v1389 = vadd.f32 %v1251, %v1349
      %1390 = vadd.xlane.f32.xlu0 %v1389
      %v1391 = vpop.xlane.xlu0 %1390
      %v1392 = vadd.f32 %v1253, %v1351
      %1393 = vadd.xlane.f32.xlu0 %v1392
      %v1394 = vpop.xlane.xlu0 %1393
      %v1395 = vadd.f32 %v1256, %v1354
      %1396 = vadd.xlane.f32.xlu0 %v1395
      %v1397 = vpop.xlane.xlu0 %1396
      %v1398 = vadd.f32 %v1258, %v1356
      %1399 = vadd.xlane.f32.xlu0 %v1398
      %v1400 = vpop.xlane.xlu0 %1399
      %v1401 = vadd.f32 %v1261, %v1359
      %1402 = vadd.xlane.f32.xlu0 %v1401
      %v1403 = vpop.xlane.xlu0 %1402
      %v1404 = vadd.f32 %v1263, %v1361
      %1405 = vadd.xlane.f32.xlu0 %v1404
      %v1406 = vpop.xlane.xlu0 %1405
      %v1407 = vadd.f32 %v1266, %v1364
      %1408 = vadd.xlane.f32.xlu0 %v1407
      %v1409 = vpop.xlane.xlu0 %1408
      %v1410 = vadd.f32 %v1268, %v1366
      %1411 = vadd.xlane.f32.xlu0 %v1410
      %v1412 = vpop.xlane.xlu0 %1411
      %v1413 = vadd.f32 %v1271, %v1369
      %1414 = vadd.xlane.f32.xlu0 %v1413
      %v1415 = vpop.xlane.xlu0 %1414
      %v1416 = vadd.f32 %v1273, %v1371
      %1417 = vadd.xlane.f32.xlu0 %v1416
      %v1418 = vpop.xlane.xlu0 %1417
      %v1419 = vadd.f32 %v1276, %v1374
      %1420 = vadd.xlane.f32.xlu0 %v1419
      %v1421 = vpop.xlane.xlu0 %1420
      %v1422 = vadd.f32 %v1278, %v1376
      %1423 = vadd.xlane.f32.xlu0 %v1422
      %v1424 = vpop.xlane.xlu0 %1423
      %v1425 = vadd.f32 %v1281, %v1379
      %1426 = vadd.xlane.f32.xlu0 %v1425
      %v1427 = vpop.xlane.xlu0 %1426
      %v1428 = vadd.f32 %v1283, %v1381
      %1429 = vadd.xlane.f32.xlu0 %v1428
      %v1430 = vpop.xlane.xlu0 %1429
      %v1431 = vmul.f32 %v1246, %v1246
      %v1432 = vmul.f32 %v1344, %v1344
      %v1433 = vmul.f32 %v1248, %v1248
      %v1434 = vmul.f32 %v1346, %v1346
      %v1435 = vmul.f32 %v1251, %v1251
      %v1436 = vmul.f32 %v1349, %v1349
      %v1437 = vmul.f32 %v1253, %v1253
      %v1438 = vmul.f32 %v1351, %v1351
      %v1439 = vmul.f32 %v1256, %v1256
      %v1440 = vmul.f32 %v1354, %v1354
      %v1441 = vmul.f32 %v1258, %v1258
      %v1442 = vmul.f32 %v1356, %v1356
      %v1443 = vmul.f32 %v1261, %v1261
      %v1444 = vmul.f32 %v1359, %v1359
      %v1445 = vmul.f32 %v1263, %v1263
      %v1446 = vmul.f32 %v1361, %v1361
      %v1447 = vmul.f32 %v1266, %v1266
      %v1448 = vmul.f32 %v1364, %v1364
      %v1449 = vmul.f32 %v1268, %v1268
      %v1450 = vmul.f32 %v1366, %v1366
      %v1451 = vmul.f32 %v1271, %v1271
      %v1452 = vmul.f32 %v1369, %v1369
      %v1453 = vmul.f32 %v1273, %v1273
      %v1454 = vmul.f32 %v1371, %v1371
      %v1455 = vmul.f32 %v1276, %v1276
      %v1456 = vmul.f32 %v1374, %v1374
      %v1457 = vmul.f32 %v1278, %v1278
      %v1458 = vmul.f32 %v1376, %v1376
      %v1459 = vmul.f32 %v1281, %v1281
      %v1460 = vmul.f32 %v1379, %v1379
      %v1461 = vmul.f32 %v1283, %v1283
      %v1462 = vmul.f32 %v1381, %v1381
      %v1463 = vadd.f32 %v1431, %v1432
      %1464 = vadd.xlane.f32.xlu0 %v1463
      %v1465 = vpop.xlane.xlu0 %1464
      %v1466 = vadd.f32 %v1433, %v1434
      %1467 = vadd.xlane.f32.xlu0 %v1466
      %v1468 = vpop.xlane.xlu0 %1467
      %v1469 = vadd.f32 %v1435, %v1436
      %1470 = vadd.xlane.f32.xlu0 %v1469
      %v1471 = vpop.xlane.xlu0 %1470
      %v1472 = vadd.f32 %v1437, %v1438
      %1473 = vadd.xlane.f32.xlu0 %v1472
      %v1474 = vpop.xlane.xlu0 %1473
      %v1475 = vadd.f32 %v1439, %v1440
      %1476 = vadd.xlane.f32.xlu0 %v1475
      %v1477 = vpop.xlane.xlu0 %1476
      %v1478 = vadd.f32 %v1441, %v1442
      %1479 = vadd.xlane.f32.xlu0 %v1478
      %v1480 = vpop.xlane.xlu0 %1479
      %v1481 = vadd.f32 %v1443, %v1444
      %1482 = vadd.xlane.f32.xlu0 %v1481
      %v1483 = vpop.xlane.xlu0 %1482
      %v1484 = vadd.f32 %v1445, %v1446
      %1485 = vadd.xlane.f32.xlu0 %v1484
      %v1486 = vpop.xlane.xlu0 %1485
      %v1487 = vadd.f32 %v1447, %v1448
      %1488 = vadd.xlane.f32.xlu0 %v1487
      %v1489 = vpop.xlane.xlu0 %1488
      %v1490 = vadd.f32 %v1449, %v1450
      %1491 = vadd.xlane.f32.xlu0 %v1490
      %v1492 = vpop.xlane.xlu0 %1491
      %v1493 = vadd.f32 %v1451, %v1452
      %1494 = vadd.xlane.f32.xlu0 %v1493
      %v1495 = vpop.xlane.xlu0 %1494
      %v1496 = vadd.f32 %v1453, %v1454
      %1497 = vadd.xlane.f32.xlu0 %v1496
      %v1498 = vpop.xlane.xlu0 %1497
      %v1499 = vadd.f32 %v1455, %v1456
      %1500 = vadd.xlane.f32.xlu0 %v1499
      %v1501 = vpop.xlane.xlu0 %1500
      %v1502 = vadd.f32 %v1457, %v1458
      %1503 = vadd.xlane.f32.xlu0 %v1502
      %v1504 = vpop.xlane.xlu0 %1503
      %v1505 = vadd.f32 %v1459, %v1460
      %1506 = vadd.xlane.f32.xlu0 %v1505
      %v1507 = vpop.xlane.xlu0 %1506
      %v1508 = vadd.f32 %v1461, %v1462
      %1509 = vadd.xlane.f32.xlu0 %v1508
      %v1510 = vpop.xlane.xlu0 %1509
      %v1511 = vmul.f32 %v1385, 0.00390625
      %v1512 = vmul.f32 %v1388, 0.00390625
      %v1513 = vmul.f32 %v1391, 0.00390625
      %v1514 = vmul.f32 %v1394, 0.00390625
      %v1515 = vmul.f32 %v1397, 0.00390625
      %v1516 = vmul.f32 %v1400, 0.00390625
      %v1517 = vmul.f32 %v1403, 0.00390625
      %v1518 = vmul.f32 %v1406, 0.00390625
      %v1519 = vmul.f32 %v1409, 0.00390625
      %v1520 = vmul.f32 %v1412, 0.00390625
      %v1521 = vmul.f32 %v1415, 0.00390625
      %v1522 = vmul.f32 %v1418, 0.00390625
      %v1523 = vmul.f32 %v1421, 0.00390625
      %v1524 = vmul.f32 %v1424, 0.00390625
      %v1525 = vmul.f32 %v1427, 0.00390625
      %v1526 = vmul.f32 %v1430, 0.00390625
      %v1527 = vmul.f32 %v1465, 0.00390625
      %v1528 = vmul.f32 %v1468, 0.00390625
      %v1529 = vmul.f32 %v1471, 0.00390625
      %v1530 = vmul.f32 %v1474, 0.00390625
      %v1531 = vmul.f32 %v1477, 0.00390625
      %v1532 = vmul.f32 %v1480, 0.00390625
      %v1533 = vmul.f32 %v1483, 0.00390625
      %v1534 = vmul.f32 %v1486, 0.00390625
      %v1535 = vmul.f32 %v1489, 0.00390625
      %v1536 = vmul.f32 %v1492, 0.00390625
      %v1537 = vmul.f32 %v1495, 0.00390625
      %v1538 = vmul.f32 %v1498, 0.00390625
      %v1539 = vmul.f32 %v1501, 0.00390625
      %v1540 = vmul.f32 %v1504, 0.00390625
      %v1541 = vmul.f32 %v1507, 0.00390625
      %v1542 = vmul.f32 %v1510, 0.00390625
      %v1543 = vmul.f32 %v1511, %v1511
      %v1544 = vmul.f32 %v1512, %v1512
      %v1545 = vmul.f32 %v1513, %v1513
      %v1546 = vmul.f32 %v1514, %v1514
      %v1547 = vmul.f32 %v1515, %v1515
      %v1548 = vmul.f32 %v1516, %v1516
      %v1549 = vmul.f32 %v1517, %v1517
      %v1550 = vmul.f32 %v1518, %v1518
      %v1551 = vmul.f32 %v1519, %v1519
      %v1552 = vmul.f32 %v1520, %v1520
      %v1553 = vmul.f32 %v1521, %v1521
      %v1554 = vmul.f32 %v1522, %v1522
      %v1555 = vmul.f32 %v1523, %v1523
      %v1556 = vmul.f32 %v1524, %v1524
      %v1557 = vmul.f32 %v1525, %v1525
      %v1558 = vmul.f32 %v1526, %v1526
      %v1559 = vsub.f32 %v1527, %v1543
      %v1560 = vsub.f32 %v1528, %v1544
      %v1561 = vsub.f32 %v1529, %v1545
      %v1562 = vsub.f32 %v1530, %v1546
      %v1563 = vsub.f32 %v1531, %v1547
      %v1564 = vsub.f32 %v1532, %v1548
      %v1565 = vsub.f32 %v1533, %v1549
      %v1566 = vsub.f32 %v1534, %v1550
      %v1567 = vsub.f32 %v1535, %v1551
      %v1568 = vsub.f32 %v1536, %v1552
      %v1569 = vsub.f32 %v1537, %v1553
      %v1570 = vsub.f32 %v1538, %v1554
      %v1571 = vsub.f32 %v1539, %v1555
      %v1572 = vsub.f32 %v1540, %v1556
      %v1573 = vsub.f32 %v1541, %v1557
      %v1574 = vsub.f32 %v1542, %v1558
      %v1575 = vmax.f32 %v1559, 0.0
      %v1576 = vmax.f32 %v1560, 0.0
      %v1577 = vmax.f32 %v1561, 0.0
      %v1578 = vmax.f32 %v1562, 0.0
      %v1579 = vmax.f32 %v1563, 0.0
      %v1580 = vmax.f32 %v1564, 0.0
      %v1581 = vmax.f32 %v1565, 0.0
      %v1582 = vmax.f32 %v1566, 0.0
      %v1583 = vmax.f32 %v1567, 0.0
      %v1584 = vmax.f32 %v1568, 0.0
      %v1585 = vmax.f32 %v1569, 0.0
      %v1586 = vmax.f32 %v1570, 0.0
      %v1587 = vmax.f32 %v1571, 0.0
      %v1588 = vmax.f32 %v1572, 0.0
      %v1589 = vmax.f32 %v1573, 0.0
      %v1590 = vmax.f32 %v1574, 0.0
      %v1591 = vsub.f32 %v1246, %v1511
      %v1592 = vsub.f32 %v1344, %v1511
      %v1593 = vsub.f32 %v1248, %v1512
      %v1594 = vsub.f32 %v1346, %v1512
      %v1595 = vsub.f32 %v1251, %v1513
      %v1596 = vsub.f32 %v1349, %v1513
      %v1597 = vsub.f32 %v1253, %v1514
      %v1598 = vsub.f32 %v1351, %v1514
      %v1599 = vsub.f32 %v1256, %v1515
      %v1600 = vsub.f32 %v1354, %v1515
      %v1601 = vsub.f32 %v1258, %v1516
      %v1602 = vsub.f32 %v1356, %v1516
      %v1603 = vsub.f32 %v1261, %v1517
      %v1604 = vsub.f32 %v1359, %v1517
      %v1605 = vsub.f32 %v1263, %v1518
      %v1606 = vsub.f32 %v1361, %v1518
      %v1607 = vsub.f32 %v1266, %v1519
      %v1608 = vsub.f32 %v1364, %v1519
      %v1609 = vsub.f32 %v1268, %v1520
      %v1610 = vsub.f32 %v1366, %v1520
      %v1611 = vsub.f32 %v1271, %v1521
      %v1612 = vsub.f32 %v1369, %v1521
      %v1613 = vsub.f32 %v1273, %v1522
      %v1614 = vsub.f32 %v1371, %v1522
      %v1615 = vsub.f32 %v1276, %v1523
      %v1616 = vsub.f32 %v1374, %v1523
      %v1617 = vsub.f32 %v1278, %v1524
      %v1618 = vsub.f32 %v1376, %v1524
      %v1619 = vsub.f32 %v1281, %v1525
      %v1620 = vsub.f32 %v1379, %v1525
      %v1621 = vsub.f32 %v1283, %v1526
      %v1622 = vsub.f32 %v1381, %v1526
      %v1623 = vadd.f32 %v1575, 1e-05
      %v1624 = vadd.f32 %v1576, 1e-05
      %v1625 = vadd.f32 %v1577, 1e-05
      %v1626 = vadd.f32 %v1578, 1e-05
      %v1627 = vadd.f32 %v1579, 1e-05
      %v1628 = vadd.f32 %v1580, 1e-05
      %v1629 = vadd.f32 %v1581, 1e-05
      %v1630 = vadd.f32 %v1582, 1e-05
      %v1631 = vadd.f32 %v1583, 1e-05
      %v1632 = vadd.f32 %v1584, 1e-05
      %v1633 = vadd.f32 %v1585, 1e-05
      %v1634 = vadd.f32 %v1586, 1e-05
      %v1635 = vadd.f32 %v1587, 1e-05
      %v1636 = vadd.f32 %v1588, 1e-05
      %v1637 = vadd.f32 %v1589, 1e-05
      %v1638 = vadd.f32 %v1590, 1e-05
      %v1639 = vrsqrt.pop %v1623
      %v1640 = vmul.f32 %v1639, %v1623
      %v1641 = vmul.f32 %v1640, %v1639
      %v1642 = vmul.f32 0.5, %v1641
      %v1643 = vsub.f32 1.5, %v1642
      %v1644 = vmul.f32 %v1639, %v1643
      %vm1645 = vweird.f32 %v1623
      %vm1646 = vweird.f32 %v1639
      %vm1647 = vmor %vm1645, %vm1646
      %v1648 = vsel %vm1647, %v1639, %v1644
      %v1649 = vrsqrt.pop %v1624
      %v1650 = vmul.f32 %v1649, %v1624
      %v1651 = vmul.f32 %v1650, %v1649
      %v1652 = vmul.f32 0.5, %v1651
      %v1653 = vsub.f32 1.5, %v1652
      %v1654 = vmul.f32 %v1649, %v1653
      %vm1655 = vweird.f32 %v1624
      %vm1656 = vweird.f32 %v1649
      %vm1657 = vmor %vm1655, %vm1656
      %v1658 = vsel %vm1657, %v1649, %v1654
      %v1659 = vrsqrt.pop %v1625
      %v1660 = vmul.f32 %v1659, %v1625
      %v1661 = vmul.f32 %v1660, %v1659
      %v1662 = vmul.f32 0.5, %v1661
      %v1663 = vsub.f32 1.5, %v1662
      %v1664 = vmul.f32 %v1659, %v1663
      %vm1665 = vweird.f32 %v1625
      %vm1666 = vweird.f32 %v1659
      %vm1667 = vmor %vm1665, %vm1666
      %v1668 = vsel %vm1667, %v1659, %v1664
      %v1669 = vrsqrt.pop %v1626
      %v1670 = vmul.f32 %v1669, %v1626
      %v1671 = vmul.f32 %v1670, %v1669
      %v1672 = vmul.f32 0.5, %v1671
      %v1673 = vsub.f32 1.5, %v1672
      %v1674 = vmul.f32 %v1669, %v1673
      %vm1675 = vweird.f32 %v1626
      %vm1676 = vweird.f32 %v1669
      %vm1677 = vmor %vm1675, %vm1676
      %v1678 = vsel %vm1677, %v1669, %v1674
      %v1679 = vrsqrt.pop %v1627
      %v1680 = vmul.f32 %v1679, %v1627
      %v1681 = vmul.f32 %v1680, %v1679
      %v1682 = vmul.f32 0.5, %v1681
      %v1683 = vsub.f32 1.5, %v1682
      %v1684 = vmul.f32 %v1679, %v1683
      %vm1685 = vweird.f32 %v1627
      %vm1686 = vweird.f32 %v1679
      %vm1687 = vmor %vm1685, %vm1686
      %v1688 = vsel %vm1687, %v1679, %v1684
      %v1689 = vrsqrt.pop %v1628
      %v1690 = vmul.f32 %v1689, %v1628
      %v1691 = vmul.f32 %v1690, %v1689
      %v1692 = vmul.f32 0.5, %v1691
      %v1693 = vsub.f32 1.5, %v1692
      %v1694 = vmul.f32 %v1689, %v1693
      %vm1695 = vweird.f32 %v1628
      %vm1696 = vweird.f32 %v1689
      %vm1697 = vmor %vm1695, %vm1696
      %v1698 = vsel %vm1697, %v1689, %v1694
      %v1699 = vrsqrt.pop %v1629
      %v1700 = vmul.f32 %v1699, %v1629
      %v1701 = vmul.f32 %v1700, %v1699
      %v1702 = vmul.f32 0.5, %v1701
      %v1703 = vsub.f32 1.5, %v1702
      %v1704 = vmul.f32 %v1699, %v1703
      %vm1705 = vweird.f32 %v1629
      %vm1706 = vweird.f32 %v1699
      %vm1707 = vmor %vm1705, %vm1706
      %v1708 = vsel %vm1707, %v1699, %v1704
      %v1709 = vrsqrt.pop %v1630
      %v1710 = vmul.f32 %v1709, %v1630
      %v1711 = vmul.f32 %v1710, %v1709
      %v1712 = vmul.f32 0.5, %v1711
      %v1713 = vsub.f32 1.5, %v1712
      %v1714 = vmul.f32 %v1709, %v1713
      %vm1715 = vweird.f32 %v1630
      %vm1716 = vweird.f32 %v1709
      %vm1717 = vmor %vm1715, %vm1716
      %v1718 = vsel %vm1717, %v1709, %v1714
      %v1719 = vrsqrt.pop %v1631
      %v1720 = vmul.f32 %v1719, %v1631
      %v1721 = vmul.f32 %v1720, %v1719
      %v1722 = vmul.f32 0.5, %v1721
      %v1723 = vsub.f32 1.5, %v1722
      %v1724 = vmul.f32 %v1719, %v1723
      %vm1725 = vweird.f32 %v1631
      %vm1726 = vweird.f32 %v1719
      %vm1727 = vmor %vm1725, %vm1726
      %v1728 = vsel %vm1727, %v1719, %v1724
      %v1729 = vrsqrt.pop %v1632
      %v1730 = vmul.f32 %v1729, %v1632
      %v1731 = vmul.f32 %v1730, %v1729
      %v1732 = vmul.f32 0.5, %v1731
      %v1733 = vsub.f32 1.5, %v1732
      %v1734 = vmul.f32 %v1729, %v1733
      %vm1735 = vweird.f32 %v1632
      %vm1736 = vweird.f32 %v1729
      %vm1737 = vmor %vm1735, %vm1736
      %v1738 = vsel %vm1737, %v1729, %v1734
      %v1739 = vrsqrt.pop %v1633
      %v1740 = vmul.f32 %v1739, %v1633
      %v1741 = vmul.f32 %v1740, %v1739
      %v1742 = vmul.f32 0.5, %v1741
      %v1743 = vsub.f32 1.5, %v1742
      %v1744 = vmul.f32 %v1739, %v1743
      %vm1745 = vweird.f32 %v1633
      %vm1746 = vweird.f32 %v1739
      %vm1747 = vmor %vm1745, %vm1746
      %v1748 = vsel %vm1747, %v1739, %v1744
      %v1749 = vrsqrt.pop %v1634
      %v1750 = vmul.f32 %v1749, %v1634
      %v1751 = vmul.f32 %v1750, %v1749
      %v1752 = vmul.f32 0.5, %v1751
      %v1753 = vsub.f32 1.5, %v1752
      %v1754 = vmul.f32 %v1749, %v1753
      %vm1755 = vweird.f32 %v1634
      %vm1756 = vweird.f32 %v1749
      %vm1757 = vmor %vm1755, %vm1756
      %v1758 = vsel %vm1757, %v1749, %v1754
      %v1759 = vrsqrt.pop %v1635
      %v1760 = vmul.f32 %v1759, %v1635
      %v1761 = vmul.f32 %v1760, %v1759
      %v1762 = vmul.f32 0.5, %v1761
      %v1763 = vsub.f32 1.5, %v1762
      %v1764 = vmul.f32 %v1759, %v1763
      %vm1765 = vweird.f32 %v1635
      %vm1766 = vweird.f32 %v1759
      %vm1767 = vmor %vm1765, %vm1766
      %v1768 = vsel %vm1767, %v1759, %v1764
      %v1769 = vrsqrt.pop %v1636
      %v1770 = vmul.f32 %v1769, %v1636
      %v1771 = vmul.f32 %v1770, %v1769
      %v1772 = vmul.f32 0.5, %v1771
      %v1773 = vsub.f32 1.5, %v1772
      %v1774 = vmul.f32 %v1769, %v1773
      %vm1775 = vweird.f32 %v1636
      %vm1776 = vweird.f32 %v1769
      %vm1777 = vmor %vm1775, %vm1776
      %v1778 = vsel %vm1777, %v1769, %v1774
      %v1779 = vrsqrt.pop %v1637
      %v1780 = vmul.f32 %v1779, %v1637
      %v1781 = vmul.f32 %v1780, %v1779
      %v1782 = vmul.f32 0.5, %v1781
      %v1783 = vsub.f32 1.5, %v1782
      %v1784 = vmul.f32 %v1779, %v1783
      %vm1785 = vweird.f32 %v1637
      %vm1786 = vweird.f32 %v1779
      %vm1787 = vmor %vm1785, %vm1786
      %v1788 = vsel %vm1787, %v1779, %v1784
      %v1789 = vrsqrt.pop %v1638
      %v1790 = vmul.f32 %v1789, %v1638
      %v1791 = vmul.f32 %v1790, %v1789
      %v1792 = vmul.f32 0.5, %v1791
      %v1793 = vsub.f32 1.5, %v1792
      %v1794 = vmul.f32 %v1789, %v1793
      %vm1795 = vweird.f32 %v1638
      %vm1796 = vweird.f32 %v1789
      %vm1797 = vmor %vm1795, %vm1796
      %v1798 = vsel %vm1797, %v1789, %v1794
      %v1799 = vmul.f32 %v1591, %v1648
      %v1800 = vmul.f32 %v1592, %v1648
      %v1801 = vmul.f32 %v1593, %v1658
      %v1802 = vmul.f32 %v1594, %v1658
      %v1803 = vmul.f32 %v1595, %v1668
      %v1804 = vmul.f32 %v1596, %v1668
      %v1805 = vmul.f32 %v1597, %v1678
      %v1806 = vmul.f32 %v1598, %v1678
      %v1807 = vmul.f32 %v1599, %v1688
      %v1808 = vmul.f32 %v1600, %v1688
      %v1809 = vmul.f32 %v1601, %v1698
      %v1810 = vmul.f32 %v1602, %v1698
      %v1811 = vmul.f32 %v1603, %v1708
      %v1812 = vmul.f32 %v1604, %v1708
      %v1813 = vmul.f32 %v1605, %v1718
      %v1814 = vmul.f32 %v1606, %v1718
      %v1815 = vmul.f32 %v1607, %v1728
      %v1816 = vmul.f32 %v1608, %v1728
      %v1817 = vmul.f32 %v1609, %v1738
      %v1818 = vmul.f32 %v1610, %v1738
      %v1819 = vmul.f32 %v1611, %v1748
      %v1820 = vmul.f32 %v1612, %v1748
      %v1821 = vmul.f32 %v1613, %v1758
      %v1822 = vmul.f32 %v1614, %v1758
      %v1823 = vmul.f32 %v1615, %v1768
      %v1824 = vmul.f32 %v1616, %v1768
      %v1825 = vmul.f32 %v1617, %v1778
      %v1826 = vmul.f32 %v1618, %v1778
      %v1827 = vmul.f32 %v1619, %v1788
      %v1828 = vmul.f32 %v1620, %v1788
      %v1829 = vmul.f32 %v1621, %v1798
      %v1830 = vmul.f32 %v1622, %v1798
      %v1832 = vperm.slane %v205, 0
      %v1833 = vperm.slane %v205, 1
      %v1836 = vmul.f32 %v1799, %v1832
      %v1837 = vmul.f32 %v1800, %v1833
      %v1838 = vmul.f32 %v1801, %v1832
      %v1839 = vmul.f32 %v1802, %v1833
      %v1840 = vmul.f32 %v1803, %v1832
      %v1841 = vmul.f32 %v1804, %v1833
      %v1842 = vmul.f32 %v1805, %v1832
      %v1843 = vmul.f32 %v1806, %v1833
      %v1844 = vmul.f32 %v1807, %v1832
      %v1845 = vmul.f32 %v1808, %v1833
      %v1846 = vmul.f32 %v1809, %v1832
      %v1847 = vmul.f32 %v1810, %v1833
      %v1848 = vmul.f32 %v1811, %v1832
      %v1849 = vmul.f32 %v1812, %v1833
      %v1850 = vmul.f32 %v1813, %v1832
      %v1851 = vmul.f32 %v1814, %v1833
      %v1852 = vmul.f32 %v1815, %v1832
      %v1853 = vmul.f32 %v1816, %v1833
      %v1854 = vmul.f32 %v1817, %v1832
      %v1855 = vmul.f32 %v1818, %v1833
      %v1856 = vmul.f32 %v1819, %v1832
      %v1857 = vmul.f32 %v1820, %v1833
      %v1858 = vmul.f32 %v1821, %v1832
      %v1859 = vmul.f32 %v1822, %v1833
      %v1860 = vmul.f32 %v1823, %v1832
      %v1861 = vmul.f32 %v1824, %v1833
      %v1862 = vmul.f32 %v1825, %v1832
      %v1863 = vmul.f32 %v1826, %v1833
      %v1864 = vmul.f32 %v1827, %v1832
      %v1865 = vmul.f32 %v1828, %v1833
      %v1866 = vmul.f32 %v1829, %v1832
      %v1867 = vmul.f32 %v1830, %v1833
      %v1869 = vperm.slane %v207, 0
      %v1870 = vperm.slane %v207, 1
      %v1873 = vadd.f32 %v1836, %v1869
      %v1874 = vadd.f32 %v1837, %v1870
      %v1875 = vadd.f32 %v1838, %v1869
      %v1876 = vadd.f32 %v1839, %v1870
      %v1877 = vadd.f32 %v1840, %v1869
      %v1878 = vadd.f32 %v1841, %v1870
      %v1879 = vadd.f32 %v1842, %v1869
      %v1880 = vadd.f32 %v1843, %v1870
      %v1881 = vadd.f32 %v1844, %v1869
      %v1882 = vadd.f32 %v1845, %v1870
      %v1883 = vadd.f32 %v1846, %v1869
      %v1884 = vadd.f32 %v1847, %v1870
      %v1885 = vadd.f32 %v1848, %v1869
      %v1886 = vadd.f32 %v1849, %v1870
      %v1887 = vadd.f32 %v1850, %v1869
      %v1888 = vadd.f32 %v1851, %v1870
      %v1889 = vadd.f32 %v1852, %v1869
      %v1890 = vadd.f32 %v1853, %v1870
      %v1891 = vadd.f32 %v1854, %v1869
      %v1892 = vadd.f32 %v1855, %v1870
      %v1893 = vadd.f32 %v1856, %v1869
      %v1894 = vadd.f32 %v1857, %v1870
      %v1895 = vadd.f32 %v1858, %v1869
      %v1896 = vadd.f32 %v1859, %v1870
      %v1897 = vadd.f32 %v1860, %v1869
      %v1898 = vadd.f32 %v1861, %v1870
      %v1899 = vadd.f32 %v1862, %v1869
      %v1900 = vadd.f32 %v1863, %v1870
      %v1901 = vadd.f32 %v1864, %v1869
      %v1902 = vadd.f32 %v1865, %v1870
      %v1903 = vadd.f32 %v1866, %v1869
      %v1904 = vadd.f32 %v1867, %v1870
      %v1905 = vmax.f32 %v1873, 0.0
      %v1906 = vmax.f32 %v1874, 0.0
      %v1907 = vmax.f32 %v1875, 0.0
      %v1908 = vmax.f32 %v1876, 0.0
      %v1909 = vmax.f32 %v1877, 0.0
      %v1910 = vmax.f32 %v1878, 0.0
      %v1911 = vmax.f32 %v1879, 0.0
      %v1912 = vmax.f32 %v1880, 0.0
      %v1913 = vmax.f32 %v1881, 0.0
      %v1914 = vmax.f32 %v1882, 0.0
      %v1915 = vmax.f32 %v1883, 0.0
      %v1916 = vmax.f32 %v1884, 0.0
      %v1917 = vmax.f32 %v1885, 0.0
      %v1918 = vmax.f32 %v1886, 0.0
      %v1919 = vmax.f32 %v1887, 0.0
      %v1920 = vmax.f32 %v1888, 0.0
      %v1921 = vmax.f32 %v1889, 0.0
      %v1922 = vmax.f32 %v1890, 0.0
      %v1923 = vmax.f32 %v1891, 0.0
      %v1924 = vmax.f32 %v1892, 0.0
      %v1925 = vmax.f32 %v1893, 0.0
      %v1926 = vmax.f32 %v1894, 0.0
      %v1927 = vmax.f32 %v1895, 0.0
      %v1928 = vmax.f32 %v1896, 0.0
      %v1929 = vmax.f32 %v1897, 0.0
      %v1930 = vmax.f32 %v1898, 0.0
      %v1931 = vmax.f32 %v1899, 0.0
      %v1932 = vmax.f32 %v1900, 0.0
      %v1933 = vmax.f32 %v1901, 0.0
      %v1934 = vmax.f32 %v1902, 0.0
      %v1935 = vmax.f32 %v1903, 0.0
      %v1936 = vmax.f32 %v1904, 0.0
      %1938 = vset.pattern.permute.xlu0 0
      %1939 = vperm.xlu0 %1938, %v210
      %v1940 = vpop.permute.xlu0 %1939
      %v1943 = vperm.slane %v209, 0
      %v1944 = vperm.slane %v209, 1
      %1947 = vmatpush.xpose.msra.mxu0 %v1935
      %1948 = vmatpush.xpose.msra.mxu0 %v1933
      %1949 = vmatpush.xpose.msra.mxu0 %v1931
      %1950 = vmatpush.xpose.msra.mxu0 %v1929
      %1951 = vmatpush.xpose.msra.mxu0 %v1927
      %1952 = vmatpush.xpose.msra.mxu0 %v1925
      %1953 = vmatpush.xpose.msra.mxu0 %v1923
      %1954 = vmatpush.xpose.msra.mxu0 %v1921
      %1955 = vmatpush.xpose.msra.mxu0 %v1919
      %1956 = vmatpush.xpose.msra.mxu0 %v1917
      %1957 = vmatpush.xpose.msra.mxu0 %v1915
      %1958 = vmatpush.xpose.msra.mxu0 %v1913
      %1959 = vmatpush.xpose.msra.mxu0 %v1911
      %1960 = vmatpush.xpose.msra.mxu0 %v1909
      %1961 = vmatpush.xpose.msra.mxu0 %v1907
      %1962 = vmatpush.xpose.msra.mxu0 %v1905
      %1963 = vmatmul.f32.gmra.mxu0 %v1943
      %v1964 = vpop.f32.mrf.mxu0
      %v1965 = vadd.f32 %v1940, %v1964
      %1966 = vdwg.mxu0
      %1967 = vmatpush.xpose.msra.mxu0 %v1936
      %1968 = vmatpush.xpose.msra.mxu0 %v1934
      %1969 = vmatpush.xpose.msra.mxu0 %v1932
      %1970 = vmatpush.xpose.msra.mxu0 %v1930
      %1971 = vmatpush.xpose.msra.mxu0 %v1928
      %1972 = vmatpush.xpose.msra.mxu0 %v1926
      %1973 = vmatpush.xpose.msra.mxu0 %v1924
      %1974 = vmatpush.xpose.msra.mxu0 %v1922
      %1975 = vmatpush.xpose.msra.mxu0 %v1920
      %1976 = vmatpush.xpose.msra.mxu0 %v1918
      %1977 = vmatpush.xpose.msra.mxu0 %v1916
      %1978 = vmatpush.xpose.msra.mxu0 %v1914
      %1979 = vmatpush.xpose.msra.mxu0 %v1912
      %1980 = vmatpush.xpose.msra.mxu0 %v1910
      %1981 = vmatpush.xpose.msra.mxu0 %v1908
      %1982 = vmatpush.xpose.msra.mxu0 %v1906
      %1983 = vmatmul.f32.gmra.mxu0 %v1944
      %v1984 = vpop.f32.mrf.mxu0
      %v1985 = vadd.f32 %v1965, %v1984
      %1986 = vdwg.mxu0
      %1987 = vst [vmem:[%s195] sm:$0x1] %v1985
      %p1988 = scmp.lt.s32.totalorder %s15, 1
      %s1989 = scalar_select %p1988, %s15, 1
      %s1990 = scalar_lea.vmem %s4, %s1989
      // Predicated region
      $region37: #{critic_forward.1} parent=35 // pred_check
        %p1991 = pneg %p122
      $region38: #{critic_forward.1} parent=35 // pred_check_branch
        %1993 = sbr.rel (%p1991) target = $region40
      $region39: #{critic_forward.1} parent=35 // pred_region
        _
      $region40: #{critic_forward.1} parent=35 // pred_fallthru
        _
    $region36: #{critic_forward.1} parent=5 // pred_fallthru
      _
    %p1994 = scmp.le.s32.totalorder 2, %s10
    // Predicated region
    $region41: #{critic_forward.1} parent=5 // pred_check
      %p1995 = pneg %p1994
    $region42: #{critic_forward.1} parent=5 // pred_check_branch
      %1997 = sbr.rel (%p1995) target = $region44
    $region43: #{critic_forward.1} parent=5 // pred_region
      %s1998 = ssub.s32 %s10, 2
      // Predicated region
      $region45: #{critic_forward.1} parent=43 // pred_check
        %p1999 = pneg %p128
      $region46: #{critic_forward.1} parent=43 // pred_check_branch
        %2001 = sbr.rel (%p1999) target = $region48
      $region47: #{critic_forward.1} parent=43 // pred_region
        %p2002 = scmp.lt.s32.totalorder %s16, 1
        %s2003 = scalar_select %p2002, %s16, 1
        %s2004 = scalar_lea.vmem %s4, %s2003
      $region48: #{critic_forward.1} parent=43 // pred_fallthru
        _
    $region44: #{critic_forward.1} parent=5 // pred_fallthru
      _
  $region6: #{critic_forward.1} parent=0 // loop_footer
    %s14 = sadd.s32 1, %s10
  $region7: #{critic_forward.1} parent=0 // loop_footer_branch
    %9 = sbr.rel target = $region3
  $region8: #{critic_forward.1} parent=0 // loop_exit
    _

</llo_original>
